<compile_context>
chip_gen: v7x
topology: tpu7x:2x2x1
jax: 0.10.0
libtpu: 0.0.40
codegen_flags: <defaults>
</compile_context>

<pallas_src>
import functools

import jax
import jax.numpy as jnp
from jax.experimental import pallas as pl
from jax.experimental.pallas import tpu as pltpu

NUM_FEATURES = 32   # num_features passed to the module
RHO = 0.05          # sparsity target (training-loss only, unused in forward)

# Layer sizes exactly as in the PyTorch module.
ENC_DIMS = [NUM_FEATURES, 84, 58, 40]
DEC_DIMS = [40, 58, 84, NUM_FEATURES]
LAYER_DIMS = list(zip(ENC_DIMS[:-1], ENC_DIMS[1:])) + \
             list(zip(DEC_DIMS[:-1], DEC_DIMS[1:]))
NUM_LAYERS = len(LAYER_DIMS)            # 6

ENC_OUT = ENC_DIMS[-1]                  # 40
PACK_WIDTH = 128                        # packed output: [enc 40 | dec 32 | 0 pad]
PACK_USED = ENC_OUT + NUM_FEATURES      # 72
WPAD = 128                              # every weight zero-padded to (128, 128)


def _sigmoid_f32(x):
    # torch.sigmoid(x) == 0.5 * tanh(0.5 * x) + 0.5 ; tanh is one EUP push per
    # vreg instead of exp + full-precision divide.
    return 0.5 * jnp.tanh(0.5 * x) + 0.5


def _autoencoder_kernel(x_ref, w_ref, b_ref, out_ref):
    """Whole encoder+decoder chain for one batch tile, resident in VMEM.

    x_ref  : (tile, 32)       bf16  input activations
    w_ref  : (6, 128, 128)    bf16  zero-padded (in, out) weights, one/layer
    b_ref  : (8, 128)         f32   zero-padded biases (rows 0..5 used)
    out_ref: (tile, 128)      f32   packed [enc | dec | 0] output slab
    """
    biases = b_ref[...]                                   # (8, 128) f32, once

    def layer(h_bf16, l, w_bf16):
        acc = jnp.dot(h_bf16, w_bf16, preferred_element_type=jnp.float32)
        z = acc + biases[l:l + 1, :]                      # f32 bias add
        return _sigmoid_f32(z)                            # f32 activation

    # Layer 0 only needs the first 32 weight rows (x has 32 lanes); every
    # later layer is a uniform (tile,128) @ (128,128) bf16 matmul.  The zero
    # weight rows/cols eliminate the sigmoid(0)=0.5 garbage pad lanes.
    h = layer(x_ref[...], 0, w_ref[0][:NUM_FEATURES, :])
    h = layer(h.astype(jnp.bfloat16), 1, w_ref[1])
    enc = layer(h.astype(jnp.bfloat16), 2, w_ref[2])
    d = layer(enc.astype(jnp.bfloat16), 3, w_ref[3])
    d = layer(d.astype(jnp.bfloat16), 4, w_ref[4])
    dec = layer(d.astype(jnp.bfloat16), 5, w_ref[5])

    tile = out_ref.shape[0]
    # Store directly into lane slices of the already-allocated out block
    # (no concatenate temp).  Pad lanes [72:128] are re-zeroed every step
    # because the full 128-wide block is written back to HBM.
    out_ref[:, PACK_USED:] = jnp.zeros((tile, PACK_WIDTH - PACK_USED),
                                       out_ref.dtype)
    out_ref[:, :ENC_OUT] = enc[:, :ENC_OUT].astype(out_ref.dtype)
    out_ref[:, ENC_OUT:PACK_USED] = dec[:, :NUM_FEATURES].astype(out_ref.dtype)


def _round_up(x, m):
    return ((x + m - 1) // m) * m


def _cdiv(a, b):
    return -(-a // b)


def _choose_tile(batch, max_tile):
    """8-granular batch tile, capped at max_tile, >= 2 grid steps once the
    batch reaches 16 rows so both v7x TensorCores get work via 'parallel'."""
    max_tile = max(8, _round_up(max_tile, 8))
    if batch >= 16:
        tile = _round_up(_cdiv(batch, 2), 8)
    else:
        tile = _round_up(max(batch, 1), 8)
    return max(8, min(tile, max_tile))


def _pack_params(params):
    """Fold [w1,b1,...,w6,b6] into one bf16 weight slab + one f32 bias slab."""
    w_slab = jnp.zeros((NUM_LAYERS, WPAD, WPAD), jnp.float32)
    b_slab = jnp.zeros((8, WPAD), jnp.float32)
    for l, (fin, fout) in enumerate(LAYER_DIMS):
        w_slab = w_slab.at[l, :fin, :fout].set(
            params[2 * l].astype(jnp.float32))
        b_slab = b_slab.at[l, :fout].set(
            params[2 * l + 1].reshape(-1).astype(jnp.float32))
    return w_slab.astype(jnp.bfloat16), b_slab


@functools.partial(jax.jit, static_argnames=("max_batch_tile",))
def sparse_kl_autoencoder_forward(x, params, max_batch_tile=1024):
    """Runs the (encoded, decoded) forward pass with a Pallas kernel.

    x: (B, NUM_FEATURES) float32
    params: flat list [w1, b1, ..., w6, b6]; wi is (in, out), bi is (1, out).
    """
    B, F = x.shape
    assert F == NUM_FEATURES

    w_slab, b_slab = _pack_params(params)

    tile = _choose_tile(B, max_batch_tile)
    B_pad = _round_up(B, tile)
    x_bf16 = x.astype(jnp.bfloat16)
    if B_pad != B:
        # Pad the batch with zero rows; padded rows only compute a cheap
        # sigmoid(bias) chain and are sliced off below.
        x_bf16 = jnp.pad(x_bf16, ((0, B_pad - B), (0, 0)))
    grid = (B_pad // tile,)

    # x / output tiled over batch; the packed weight/bias slabs are full
    # (untiled) blocks resident in VMEM across all grid steps.
    x_spec = pl.BlockSpec((tile, F), lambda i: (i, 0))
    w_spec = pl.BlockSpec(w_slab.shape, lambda i: (0, 0, 0))
    b_spec = pl.BlockSpec(b_slab.shape, lambda i: (0, 0))
    out_spec = pl.BlockSpec((tile, PACK_WIDTH), lambda i: (i, 0))

    packed = pl.pallas_call(
        _autoencoder_kernel,
        out_shape=jax.ShapeDtypeStruct((B_pad, PACK_WIDTH), jnp.float32),
        grid_spec=pltpu.PrefetchScalarGridSpec(
            num_scalar_prefetch=0,
            grid=grid,
            in_specs=[x_spec, w_spec, b_spec],
            out_specs=out_spec,
        ),
        compiler_params=pltpu.CompilerParams(
            dimension_semantics=("parallel",),
        ),
    )(x_bf16, w_slab, b_slab)

    encoded = packed[:B, :ENC_OUT]
    decoded = packed[:B, ENC_OUT:PACK_USED]
    return encoded, decoded


def init_params(key):
    """Deterministic PyTorch-style init: U(-1/sqrt(fan_in), 1/sqrt(fan_in))."""
    params = []
    for (fan_in, fan_out) in LAYER_DIMS:
        key, kw, kb = jax.random.split(key, 3)
        bound = 1.0 / jnp.sqrt(jnp.float32(fan_in))
        w = jax.random.uniform(kw, (fan_in, fan_out), jnp.float32,
                               minval=-bound, maxval=bound)
        b = jax.random.uniform(kb, (1, fan_out), jnp.float32,
                               minval=-bound, maxval=bound)
        params.extend([w, b])
    return params


def reference_forward(x, params):
    """Pure-JAX f32 reference of the PyTorch forward for verification."""
    h = x
    encoded = None
    for i in range(0, NUM_LAYERS * 2, 2):
        w, b = params[i], params[i + 1]
        h = jax.nn.sigmoid(h @ w + b)
        if i == 4:  # after 3rd encoder layer
            encoded = h
    return encoded, h


if __name__ == "__main__":
    key = jax.random.PRNGKey(0)
    key, kx, kx2 = jax.random.split(key, 3)
    params = init_params(key)

    # Non-multiple batch exercises padding + the 2-step "parallel" grid path
    # (tile = 152 for B = 300).
    batch = 300
    x = jax.random.normal(kx, (batch, NUM_FEATURES), jnp.float32)
    encoded, decoded = sparse_kl_autoencoder_forward(x, params)
    encoded, decoded = jax.block_until_ready((encoded, decoded))

    enc_ref, dec_ref = reference_forward(x, params)
    assert encoded.shape == (batch, ENC_OUT)
    assert decoded.shape == (batch, NUM_FEATURES)
    # bf16 matmul operands (f32 accumulate) -> tolerances relaxed vs f32 ref.
    assert jnp.allclose(encoded, enc_ref, atol=3e-2, rtol=3e-2)
    assert jnp.allclose(decoded, dec_ref, atol=3e-2, rtol=3e-2)

    # Tiny-batch path (single 8-row grid step).
    x2 = jax.random.normal(kx2, (5, NUM_FEATURES), jnp.float32)
    enc2, dec2 = jax.block_until_ready(
        sparse_kl_autoencoder_forward(x2, params))
    enc2_ref, dec2_ref = reference_forward(x2, params)
    assert enc2.shape == (5, ENC_OUT) and dec2.shape == (5, NUM_FEATURES)
    assert jnp.allclose(enc2, enc2_ref, atol=3e-2, rtol=3e-2)
    assert jnp.allclose(dec2, dec2_ref, atol=3e-2, rtol=3e-2)

    # TODO(synk): kl_divergence / loss_function are training-time losses, not
    # part of forward(); left to plain JAX if needed.
    print("KERNEL_OK")
</pallas_src>

<mosaic_0001>
module attributes {stable_mosaic.version = 11 : i64} {
  func.func @_autoencoder_kernel(%arg0: i32, %arg1: memref<152x32xbf16, #tpu.memory_space<vmem>>, %arg2: memref<6x128x128xbf16, #tpu.memory_space<vmem>>, %arg3: memref<8x128xf32, #tpu.memory_space<vmem>>, %arg4: memref<152x128xf32, #tpu.memory_space<vmem>>) attributes {dimension_semantics = [#tpu.dimension_semantics<parallel>], iteration_bounds = array<i64: 2>, scalar_prefetch = 0 : i64, scratch_operands = 0 : i64, tpu.core_type = #tpu.core_type<tc>, window_params = [{transform_indices = @transform_0, window_bounds = array<i64: 152, 32>}, {pipeline_mode = #tpu.pipeline_mode<synchronous>, transform_indices = @transform_1, window_bounds = array<i64: 6, 128, 128>}, {pipeline_mode = #tpu.pipeline_mode<synchronous>, transform_indices = @transform_2, window_bounds = array<i64: 8, 128>}, {transform_indices = @transform_3, window_bounds = array<i64: 152, 128>}]} {
    %c0 = arith.constant 0 : index
    %c0_0 = arith.constant 0 : index
    %0 = vector.load %arg3[%c0, %c0_0] : memref<8x128xf32, #tpu.memory_space<vmem>>, vector<8x128xf32>
    %c0_1 = arith.constant 0 : index
    %c0_2 = arith.constant 0 : index
    %1 = vector.load %arg1[%c0_1, %c0_2] : memref<152x32xbf16, #tpu.memory_space<vmem>>, vector<152x32xbf16>
    %c0_3 = arith.constant 0 : index
    %c0_4 = arith.constant 0 : index
    %c0_5 = arith.constant 0 : index
    %2 = vector.load %arg2[%c0_3, %c0_4, %c0_5] : memref<6x128x128xbf16, #tpu.memory_space<vmem>>, vector<1x128x128xbf16>
    %3 = vector.shape_cast %2 : vector<1x128x128xbf16> to vector<128x128xbf16>
    %4 = vector.extract_strided_slice %3 {offsets = [0, 0], sizes = [32, 128], strides = [1, 1]} : vector<128x128xbf16> to vector<32x128xbf16>
    %cst = arith.constant dense<0.000000e+00> : vector<152x128xf32>
    %5 = tpu.matmul %1, %4, %cst {dimension_numbers = #tpu.dot_dimension_numbers<[1], [0], [0], [1], [0, 0, 1, 1], [], []>} : vector<152x32xbf16>, vector<32x128xbf16>, vector<152x128xf32> -> vector<152x128xf32>
    %6 = vector.extract_strided_slice %0 {offsets = [0, 0], sizes = [1, 128], strides = [1, 1]} : vector<8x128xf32> to vector<1x128xf32>
    %7 = vector.broadcast %6 : vector<1x128xf32> to vector<152x128xf32>
    %8 = arith.addf %5, %7 : vector<152x128xf32>
    %cst_6 = arith.constant 5.000000e-01 : f32
    %9 = vector.broadcast %cst_6 : f32 to vector<152x128xf32>
    %10 = arith.mulf %9, %8 : vector<152x128xf32>
    %11 = math.tanh %10 : vector<152x128xf32>
    %cst_7 = arith.constant 5.000000e-01 : f32
    %12 = vector.broadcast %cst_7 : f32 to vector<152x128xf32>
    %13 = arith.mulf %12, %11 : vector<152x128xf32>
    %cst_8 = arith.constant 5.000000e-01 : f32
    %14 = vector.broadcast %cst_8 : f32 to vector<152x128xf32>
    %15 = arith.addf %13, %14 : vector<152x128xf32>
    %16 = arith.truncf %15 : vector<152x128xf32> to vector<152x128xbf16>
    %c1 = arith.constant 1 : index
    %c0_9 = arith.constant 0 : index
    %c0_10 = arith.constant 0 : index
    %17 = vector.load %arg2[%c1, %c0_9, %c0_10] : memref<6x128x128xbf16, #tpu.memory_space<vmem>>, vector<1x128x128xbf16>
    %18 = vector.shape_cast %17 : vector<1x128x128xbf16> to vector<128x128xbf16>
    %cst_11 = arith.constant dense<0.000000e+00> : vector<152x128xf32>
    %19 = tpu.matmul %16, %18, %cst_11 {dimension_numbers = #tpu.dot_dimension_numbers<[1], [0], [0], [1], [0, 0, 1, 1], [], []>} : vector<152x128xbf16>, vector<128x128xbf16>, vector<152x128xf32> -> vector<152x128xf32>
    %20 = vector.extract_strided_slice %0 {offsets = [1, 0], sizes = [1, 128], strides = [1, 1]} : vector<8x128xf32> to vector<1x128xf32>
    %21 = vector.broadcast %20 : vector<1x128xf32> to vector<152x128xf32>
    %22 = arith.addf %19, %21 : vector<152x128xf32>
    %cst_12 = arith.constant 5.000000e-01 : f32
    %23 = vector.broadcast %cst_12 : f32 to vector<152x128xf32>
    %24 = arith.mulf %23, %22 : vector<152x128xf32>
    %25 = math.tanh %24 : vector<152x128xf32>
    %cst_13 = arith.constant 5.000000e-01 : f32
    %26 = vector.broadcast %cst_13 : f32 to vector<152x128xf32>
    %27 = arith.mulf %26, %25 : vector<152x128xf32>
    %cst_14 = arith.constant 5.000000e-01 : f32
    %28 = vector.broadcast %cst_14 : f32 to vector<152x128xf32>
    %29 = arith.addf %27, %28 : vector<152x128xf32>
    %30 = arith.truncf %29 : vector<152x128xf32> to vector<152x128xbf16>
    %c2 = arith.constant 2 : index
    %c0_15 = arith.constant 0 : index
    %c0_16 = arith.constant 0 : index
    %31 = vector.load %arg2[%c2, %c0_15, %c0_16] : memref<6x128x128xbf16, #tpu.memory_space<vmem>>, vector<1x128x128xbf16>
    %32 = vector.shape_cast %31 : vector<1x128x128xbf16> to vector<128x128xbf16>
    %cst_17 = arith.constant dense<0.000000e+00> : vector<152x128xf32>
    %33 = tpu.matmul %30, %32, %cst_17 {dimension_numbers = #tpu.dot_dimension_numbers<[1], [0], [0], [1], [0, 0, 1, 1], [], []>} : vector<152x128xbf16>, vector<128x128xbf16>, vector<152x128xf32> -> vector<152x128xf32>
    %34 = vector.extract_strided_slice %0 {offsets = [2, 0], sizes = [1, 128], strides = [1, 1]} : vector<8x128xf32> to vector<1x128xf32>
    %35 = vector.broadcast %34 : vector<1x128xf32> to vector<152x128xf32>
    %36 = arith.addf %33, %35 : vector<152x128xf32>
    %cst_18 = arith.constant 5.000000e-01 : f32
    %37 = vector.broadcast %cst_18 : f32 to vector<152x128xf32>
    %38 = arith.mulf %37, %36 : vector<152x128xf32>
    %39 = math.tanh %38 : vector<152x128xf32>
    %cst_19 = arith.constant 5.000000e-01 : f32
    %40 = vector.broadcast %cst_19 : f32 to vector<152x128xf32>
    %41 = arith.mulf %40, %39 : vector<152x128xf32>
    %cst_20 = arith.constant 5.000000e-01 : f32
    %42 = vector.broadcast %cst_20 : f32 to vector<152x128xf32>
    %43 = arith.addf %41, %42 : vector<152x128xf32>
    %44 = arith.truncf %43 : vector<152x128xf32> to vector<152x128xbf16>
    %c3 = arith.constant 3 : index
    %c0_21 = arith.constant 0 : index
    %c0_22 = arith.constant 0 : index
    %45 = vector.load %arg2[%c3, %c0_21, %c0_22] : memref<6x128x128xbf16, #tpu.memory_space<vmem>>, vector<1x128x128xbf16>
    %46 = vector.shape_cast %45 : vector<1x128x128xbf16> to vector<128x128xbf16>
    %cst_23 = arith.constant dense<0.000000e+00> : vector<152x128xf32>
    %47 = tpu.matmul %44, %46, %cst_23 {dimension_numbers = #tpu.dot_dimension_numbers<[1], [0], [0], [1], [0, 0, 1, 1], [], []>} : vector<152x128xbf16>, vector<128x128xbf16>, vector<152x128xf32> -> vector<152x128xf32>
    %48 = vector.extract_strided_slice %0 {offsets = [3, 0], sizes = [1, 128], strides = [1, 1]} : vector<8x128xf32> to vector<1x128xf32>
    %49 = vector.broadcast %48 : vector<1x128xf32> to vector<152x128xf32>
    %50 = arith.addf %47, %49 : vector<152x128xf32>
    %cst_24 = arith.constant 5.000000e-01 : f32
    %51 = vector.broadcast %cst_24 : f32 to vector<152x128xf32>
    %52 = arith.mulf %51, %50 : vector<152x128xf32>
    %53 = math.tanh %52 : vector<152x128xf32>
    %cst_25 = arith.constant 5.000000e-01 : f32
    %54 = vector.broadcast %cst_25 : f32 to vector<152x128xf32>
    %55 = arith.mulf %54, %53 : vector<152x128xf32>
    %cst_26 = arith.constant 5.000000e-01 : f32
    %56 = vector.broadcast %cst_26 : f32 to vector<152x128xf32>
    %57 = arith.addf %55, %56 : vector<152x128xf32>
    %58 = arith.truncf %57 : vector<152x128xf32> to vector<152x128xbf16>
    %c4 = arith.constant 4 : index
    %c0_27 = arith.constant 0 : index
    %c0_28 = arith.constant 0 : index
    %59 = vector.load %arg2[%c4, %c0_27, %c0_28] : memref<6x128x128xbf16, #tpu.memory_space<vmem>>, vector<1x128x128xbf16>
    %60 = vector.shape_cast %59 : vector<1x128x128xbf16> to vector<128x128xbf16>
    %cst_29 = arith.constant dense<0.000000e+00> : vector<152x128xf32>
    %61 = tpu.matmul %58, %60, %cst_29 {dimension_numbers = #tpu.dot_dimension_numbers<[1], [0], [0], [1], [0, 0, 1, 1], [], []>} : vector<152x128xbf16>, vector<128x128xbf16>, vector<152x128xf32> -> vector<152x128xf32>
    %62 = vector.extract_strided_slice %0 {offsets = [4, 0], sizes = [1, 128], strides = [1, 1]} : vector<8x128xf32> to vector<1x128xf32>
    %63 = vector.broadcast %62 : vector<1x128xf32> to vector<152x128xf32>
    %64 = arith.addf %61, %63 : vector<152x128xf32>
    %cst_30 = arith.constant 5.000000e-01 : f32
    %65 = vector.broadcast %cst_30 : f32 to vector<152x128xf32>
    %66 = arith.mulf %65, %64 : vector<152x128xf32>
    %67 = math.tanh %66 : vector<152x128xf32>
    %cst_31 = arith.constant 5.000000e-01 : f32
    %68 = vector.broadcast %cst_31 : f32 to vector<152x128xf32>
    %69 = arith.mulf %68, %67 : vector<152x128xf32>
    %cst_32 = arith.constant 5.000000e-01 : f32
    %70 = vector.broadcast %cst_32 : f32 to vector<152x128xf32>
    %71 = arith.addf %69, %70 : vector<152x128xf32>
    %72 = arith.truncf %71 : vector<152x128xf32> to vector<152x128xbf16>
    %c5 = arith.constant 5 : index
    %c0_33 = arith.constant 0 : index
    %c0_34 = arith.constant 0 : index
    %73 = vector.load %arg2[%c5, %c0_33, %c0_34] : memref<6x128x128xbf16, #tpu.memory_space<vmem>>, vector<1x128x128xbf16>
    %74 = vector.shape_cast %73 : vector<1x128x128xbf16> to vector<128x128xbf16>
    %cst_35 = arith.constant dense<0.000000e+00> : vector<152x128xf32>
    %75 = tpu.matmul %72, %74, %cst_35 {dimension_numbers = #tpu.dot_dimension_numbers<[1], [0], [0], [1], [0, 0, 1, 1], [], []>} : vector<152x128xbf16>, vector<128x128xbf16>, vector<152x128xf32> -> vector<152x128xf32>
    %76 = vector.extract_strided_slice %0 {offsets = [5, 0], sizes = [1, 128], strides = [1, 1]} : vector<8x128xf32> to vector<1x128xf32>
    %77 = vector.broadcast %76 : vector<1x128xf32> to vector<152x128xf32>
    %78 = arith.addf %75, %77 : vector<152x128xf32>
    %cst_36 = arith.constant 5.000000e-01 : f32
    %79 = vector.broadcast %cst_36 : f32 to vector<152x128xf32>
    %80 = arith.mulf %79, %78 : vector<152x128xf32>
    %81 = math.tanh %80 : vector<152x128xf32>
    %cst_37 = arith.constant 5.000000e-01 : f32
    %82 = vector.broadcast %cst_37 : f32 to vector<152x128xf32>
    %83 = arith.mulf %82, %81 : vector<152x128xf32>
    %cst_38 = arith.constant 5.000000e-01 : f32
    %84 = vector.broadcast %cst_38 : f32 to vector<152x128xf32>
    %85 = arith.addf %83, %84 : vector<152x128xf32>
    %cst_39 = arith.constant 0.000000e+00 : f32
    %86 = vector.broadcast %cst_39 : f32 to vector<152x56xf32>
    %c0_40 = arith.constant 0 : index
    %c72 = arith.constant 72 : index
    %87 = vector.load %arg4[%c0_40, %c72] : memref<152x128xf32, #tpu.memory_space<vmem>>, vector<152x56xf32>
    tpu.vector_store %arg4[%c0_40, %c72], %86 {strides = array<i32>} : memref<152x128xf32, #tpu.memory_space<vmem>>, vector<152x56xf32>,
    %88 = vector.extract_strided_slice %43 {offsets = [0, 0], sizes = [152, 40], strides = [1, 1]} : vector<152x128xf32> to vector<152x40xf32>
    %c0_41 = arith.constant 0 : index
    %c0_42 = arith.constant 0 : index
    %89 = vector.load %arg4[%c0_41, %c0_42] : memref<152x128xf32, #tpu.memory_space<vmem>>, vector<152x40xf32>
    tpu.vector_store %arg4[%c0_41, %c0_42], %88 {strides = array<i32>} : memref<152x128xf32, #tpu.memory_space<vmem>>, vector<152x40xf32>,
    %90 = vector.extract_strided_slice %85 {offsets = [0, 0], sizes = [152, 32], strides = [1, 1]} : vector<152x128xf32> to vector<152x32xf32>
    %c0_43 = arith.constant 0 : index
    %c40 = arith.constant 40 : index
    %91 = vector.load %arg4[%c0_43, %c40] : memref<152x128xf32, #tpu.memory_space<vmem>>, vector<152x32xf32>
    tpu.vector_store %arg4[%c0_43, %c40], %90 {strides = array<i32>} : memref<152x128xf32, #tpu.memory_space<vmem>>, vector<152x32xf32>,
    return
  }
  func.func @transform_0(%arg0: i32) -> (i32, i32) {
    %c0_i32 = arith.constant 0 : i32
    %c0_i32_0 = arith.constant 0 : i32
    return %arg0, %c0_i32 : i32, i32
  }
  func.func @transform_1(%arg0: i32) -> (i32, i32, i32) {
    %c0_i32 = arith.constant 0 : i32
    %c0_i32_0 = arith.constant 0 : i32
    %c0_i32_1 = arith.constant 0 : i32
    %c0_i32_2 = arith.constant 0 : i32
    return %c0_i32, %c0_i32_0, %c0_i32_1 : i32, i32, i32
  }
  func.func @transform_2(%arg0: i32) -> (i32, i32) {
    %c0_i32 = arith.constant 0 : i32
    %c0_i32_0 = arith.constant 0 : i32
    %c0_i32_1 = arith.constant 0 : i32
    return %c0_i32, %c0_i32_0 : i32, i32
  }
  func.func @transform_3(%arg0: i32) -> (i32, i32) {
    %c0_i32 = arith.constant 0 : i32
    %c0_i32_0 = arith.constant 0 : i32
    return %arg0, %c0_i32 : i32, i32
  }
}

</mosaic_0001>

<llo_original>
// kernel: sparse_kl_autoencoder_forward.1
$region0: #{sparse_kl_autoencoder_forward.1}
  #allocation0 [shape = 'u32[]', space=smem, size = 0x4, offset = 0x4, fixed_abs, tag = 'smem constant byte address 0x4 - core index']
  #allocation1 [shape = 'u32[144,128]{1,0:T(1,128)}', space=vmem, size = 0x12000, scoped, tag = 'internal scratch']
  %s0 = inlined_call_operand.vmem [shape: bf16[304,32], index: 0, kind: input, shape index: {}]
  %s1 = inlined_call_operand.vmem [shape: bf16[6,128,128], index: 1, kind: input, shape index: {}]
  %s2 = inlined_call_operand.vmem [shape: f32[8,128], index: 2, kind: input, shape index: {}]
  %s3 = inlined_call_operand.vmem [shape: f32[304,128], index: 3, kind: output, shape index: {}]
  %s4 = sld [smem:[#allocation0]]
  $region45: #{sparse_kl_autoencoder_forward.1} parent=0
    _
  %s6 = ssub.s32 1, %s4
  %s7 = scalar_select 0, %s6, %s4
  loop: start=0, step=1, limit=4
  $region2: #{sparse_kl_autoencoder_forward.1} parent=0 // loop_pre_header
    _
  $region3: #{sparse_kl_autoencoder_forward.1} parent=0 // loop_header
    %s9 = sphi 0, %s13
    %p10 = scmp.ge.s32.totalorder %s9, 4
    %s19 = sphi 0, %s21
    %s22 = sphi 0, %s19
    %s23 = sphi 0, %s22
    %s39 = sphi 0, %s23
    %s43 = sphi 0, %s43
    %s45 = sphi 0, %s43
    %s46 = sphi 0, %s45
    %s60 = sphi 0, %s46
    %s64 = sphi 0, %s64
    %s66 = sphi 0, %s64
    %s67 = sphi 0, %s66
    %s81 = sphi 0, %s67
    %s87 = sphi 0, %s89
    %s90 = sphi 0, %s87
    %s91 = sphi 0, %s90
    %s107 = sphi 0, %s91
  $region4: #{sparse_kl_autoencoder_forward.1} parent=0 // loop_header_branch
    %12 = sbr.rel (%p10) target = $region8
  $region5: #{sparse_kl_autoencoder_forward.1} parent=0 // loop_body
    %s14 = ssub.s32 %s9, 1
    %s15 = ssub.s32 %s9, 2
    %s16 = sadd.s32 %s9, 1
    %s17 = ssub.s32 %s9, %s16
    %p18 = scmp.eq.s32.totalorder %s17, 0
    %s20 = sadd.s32 %s19, 1
    %s21 = scalar_select %p18, %s19, %s20
    %p24 = pneg %p18
    %p25 = scmp.eq.s32.totalorder %s9, 1
    %p26 = por %p24, %p25
    %p27 = scmp.ne.s32.totalorder %s19, %s22
    %p28 = scmp.eq.s32.totalorder %s9, 0
    %p29 = por %p27, %p28
    %p30 = scmp.ne.s32.totalorder %s19, %s22
    %p31 = scmp.eq.s32.totalorder %s14, 1
    %p32 = por %p30, %p31
    %p33 = scmp.ne.s32.totalorder %s22, %s23
    %p34 = scmp.eq.s32.totalorder %s14, 0
    %p35 = por %p33, %p34
    %p36 = scmp.ne.s32.totalorder %s22, %s23
    %p37 = scmp.eq.s32.totalorder %s15, 1
    %p38 = por %p36, %p37
    %p40 = scmp.ne.s32.totalorder %s23, %s39
    %p41 = scmp.eq.s32.totalorder %s15, 0
    %p42 = por %p40, %p41
    %s44 = sadd.s32 %s43, 1
    %p47 = scmp.eq.s32.totalorder %s9, 1
    %p48 = scmp.ne.s32.totalorder %s43, %s45
    %p49 = scmp.eq.s32.totalorder %s9, 0
    %p50 = por %p48, %p49
    %p51 = scmp.ne.s32.totalorder %s43, %s45
    %p52 = scmp.eq.s32.totalorder %s14, 1
    %p53 = por %p51, %p52
    %p54 = scmp.ne.s32.totalorder %s45, %s46
    %p55 = scmp.eq.s32.totalorder %s14, 0
    %p56 = por %p54, %p55
    %p57 = scmp.ne.s32.totalorder %s45, %s46
    %p58 = scmp.eq.s32.totalorder %s15, 1
    %p59 = por %p57, %p58
    %p61 = scmp.ne.s32.totalorder %s46, %s60
    %p62 = scmp.eq.s32.totalorder %s15, 0
    %p63 = por %p61, %p62
    %s65 = sadd.s32 %s64, 1
    %p68 = scmp.eq.s32.totalorder %s9, 1
    %p69 = scmp.ne.s32.totalorder %s64, %s66
    %p70 = scmp.eq.s32.totalorder %s9, 0
    %p71 = por %p69, %p70
    %p72 = scmp.ne.s32.totalorder %s64, %s66
    %p73 = scmp.eq.s32.totalorder %s14, 1
    %p74 = por %p72, %p73
    %p75 = scmp.ne.s32.totalorder %s66, %s67
    %p76 = scmp.eq.s32.totalorder %s14, 0
    %p77 = por %p75, %p76
    %p78 = scmp.ne.s32.totalorder %s66, %s67
    %p79 = scmp.eq.s32.totalorder %s15, 1
    %p80 = por %p78, %p79
    %p82 = scmp.ne.s32.totalorder %s67, %s81
    %p83 = scmp.eq.s32.totalorder %s15, 0
    %p84 = por %p82, %p83
    %s85 = ssub.s32 %s9, %s16
    %p86 = scmp.eq.s32.totalorder %s85, 0
    %s88 = sadd.s32 %s87, 1
    %s89 = scalar_select %p86, %s87, %s88
    %p92 = pneg %p86
    %p93 = scmp.eq.s32.totalorder %s9, 1
    %p94 = por %p92, %p93
    %p95 = scmp.ne.s32.totalorder %s87, %s90
    %p96 = scmp.eq.s32.totalorder %s9, 0
    %p97 = por %p95, %p96
    %p98 = scmp.ne.s32.totalorder %s87, %s90
    %p99 = scmp.eq.s32.totalorder %s14, 1
    %p100 = por %p98, %p99
    %p101 = scmp.ne.s32.totalorder %s90, %s91
    %p102 = scmp.eq.s32.totalorder %s14, 0
    %p103 = por %p101, %p102
    %p104 = scmp.ne.s32.totalorder %s90, %s91
    %p105 = scmp.eq.s32.totalorder %s15, 1
    %p106 = por %p104, %p105
    %p108 = scmp.ne.s32.totalorder %s91, %s107
    %p109 = scmp.eq.s32.totalorder %s15, 0
    %p110 = por %p108, %p109
    %p111 = scmp.le.s32.totalorder 1, %s9
    %p112 = scmp.lt.s32.totalorder %s9, 3
    %p113 = pnand %p111, %p112
    %p114 = pneg %p113
    // Predicated region
    $region9: #{sparse_kl_autoencoder_forward.1} parent=5 // pred_check
      _
    $region10: #{sparse_kl_autoencoder_forward.1} parent=5 // pred_check_branch
      %116 = sbr.rel (%p113) target = $region12
    $region11: #{sparse_kl_autoencoder_forward.1} parent=5 // pred_region
      %s117 = ssub.s32 %s9, 1
      // Predicated region
      $region13: #{sparse_kl_autoencoder_forward.1} parent=11 // pred_check
        %p118 = pneg %p56
      $region14: #{sparse_kl_autoencoder_forward.1} parent=11 // pred_check_branch
        %120 = sbr.rel (%p118) target = $region16
      $region15: #{sparse_kl_autoencoder_forward.1} parent=11 // pred_region
        _
      $region16: #{sparse_kl_autoencoder_forward.1} parent=11 // pred_fallthru
        _
      // Predicated region
      $region17: #{sparse_kl_autoencoder_forward.1} parent=11 // pred_check
        %p121 = pneg %p77
      $region18: #{sparse_kl_autoencoder_forward.1} parent=11 // pred_check_branch
        %123 = sbr.rel (%p121) target = $region20
      $region19: #{sparse_kl_autoencoder_forward.1} parent=11 // pred_region
        _
      $region20: #{sparse_kl_autoencoder_forward.1} parent=11 // pred_fallthru
        _
    $region12: #{sparse_kl_autoencoder_forward.1} parent=5 // pred_fallthru
      _
    %p124 = scmp.lt.s32.totalorder %s9, 2
    // Predicated region
    $region21: #{sparse_kl_autoencoder_forward.1} parent=5 // pred_check
      %p125 = pneg %p124
    $region22: #{sparse_kl_autoencoder_forward.1} parent=5 // pred_check_branch
      %127 = sbr.rel (%p125) target = $region24
    $region23: #{sparse_kl_autoencoder_forward.1} parent=5 // pred_region
      // Predicated region
      $region25: #{sparse_kl_autoencoder_forward.1} parent=23 // pred_check
        %p128 = pneg %p29
      $region26: #{sparse_kl_autoencoder_forward.1} parent=23 // pred_check_branch
        %130 = sbr.rel (%p128) target = $region28
      $region27: #{sparse_kl_autoencoder_forward.1} parent=23 // pred_region
        %s131 = smul.u32 19, %s9
        %p132 = scmp.lt.s32.totalorder %s131, 37
        %s133 = scalar_select %p132, %s131, 37
        %s134 = smul.addr %s133, 4
        %s135 = scalar_lea.vmem %s0, %s134
        %s136 = smul.u32 19, %s9
      $region28: #{sparse_kl_autoencoder_forward.1} parent=23 // pred_fallthru
        _
    $region24: #{sparse_kl_autoencoder_forward.1} parent=5 // pred_fallthru
      _
    %p137 = scmp.le.s32.totalorder 1, %s9
    %p138 = scmp.lt.s32.totalorder %s9, 3
    %p139 = pnand %p137, %p138
    %p140 = pneg %p139
    // Predicated region
    $region29: #{sparse_kl_autoencoder_forward.1} parent=5 // pred_check
      _
    $region30: #{sparse_kl_autoencoder_forward.1} parent=5 // pred_check_branch
      %142 = sbr.rel (%p139) target = $region32
    $region31: #{sparse_kl_autoencoder_forward.1} parent=5 // pred_region
      %s143 = ssub.s32 %s9, 1
      %s144 = smul.u32 19, %s14
      %p145 = scmp.lt.s32.totalorder %s144, 37
      %s146 = scalar_select %p145, %s144, 37
      %s147 = smul.addr %s146, 4
      %s148 = scalar_lea.vmem %s0, %s147
      %p149 = pneg %p35
      %p150 = pneg %p32
      %p151 = pneg %p56
      %p152 = pneg %p53
      %p153 = pneg %p77
      %p154 = pneg %p74
      %p155 = pneg %p103
      %p156 = pneg %p100
      %s157 = smul.u32 19, %s14
      %p158 = scmp.lt.s32.totalorder %s157, 37
      %s159 = scalar_select %p158, %s157, 37
      %s160 = smul.addr %s159, 8
      %s161 = scalar_lea.vmem %s3, %s160
      %s162 = smul.u32 19, %s14
      %p163 = scmp.lt.s32.totalorder %s162, 37
      %s164 = scalar_select %p163, %s162, 37
      %s165 = smul.addr %s164, 4
      %s166 = scalar_lea.vmem %s0, %s165
      %s167 = smul.u32 19, %s14
      %s168 = smul.u32 19, %s14
      %p169 = scmp.lt.s32.totalorder %s168, 37
      %s170 = scalar_select %p169, %s168, 37
      %s171 = smul.addr %s170, 8
      %s172 = scalar_lea.vmem %s3, %s171
      %s173 = smul.u32 19, %s14
      %v175 = vld [vmem:[%s2] sm:$0xff]
      %v176 = vld [vmem:[%s166] sm:$0xf]
      %v177 = vld [vmem:[%s166 + $0x4] sm:$0xf]
      %v178 = vld [vmem:[%s166 + $0x8] sm:$0xf]
      %v179 = vld [vmem:[%s166 + $0xc] sm:$0xf]
      %v180 = vld [vmem:[%s166 + $0x10] sm:$0xf]
      %v181 = vld [vmem:[%s166 + $0x14] sm:$0xf]
      %v182 = vld [vmem:[%s166 + $0x18] sm:$0xf]
      %v183 = vld [vmem:[%s166 + $0x1c] sm:$0xf]
      %v184 = vld [vmem:[%s166 + $0x20] sm:$0xf]
      %v185 = vld [vmem:[%s166 + $0x24] sm:$0xf]
      %v186 = vld [vmem:[%s166 + $0x28] sm:$0xf]
      %v187 = vld [vmem:[%s166 + $0x2c] sm:$0xf]
      %v188 = vld [vmem:[%s166 + $0x30] sm:$0xf]
      %v189 = vld [vmem:[%s166 + $0x34] sm:$0xf]
      %v190 = vld [vmem:[%s166 + $0x38] sm:$0xf]
      %v191 = vld [vmem:[%s166 + $0x3c] sm:$0xf]
      %v192 = vld [vmem:[%s166 + $0x40] sm:$0xf]
      %v193 = vld [vmem:[%s166 + $0x44] sm:$0xf]
      %v194 = vld [vmem:[%s166 + $0x48] sm:$0xf]
      %v195 = vld [vmem:[%s1] sm:$0xf]
      %v196 = vld [vmem:[%s1 + $0x4] sm:$0xf]
      %v197 = vld [vmem:[%s1 + $0x8] sm:$0xf]
      %v198 = vld [vmem:[%s1 + $0xc] sm:$0xf]
      %v199 = vlaneseq
      %v200 = vshrl.u32 %v199, 7
      %v201 = vsub.s32 0, %v200
      %v202 = vrot.slane %v175, %v201
      %v222 = vunpack.c.l.b16 %v176
      %v223 = vunpack.c.l.b16 %v177
      %v224 = vunpack.c.l.b16 %v178
      %v225 = vunpack.c.l.b16 %v179
      %v226 = vunpack.c.l.b16 %v180
      %v227 = vunpack.c.l.b16 %v181
      %v228 = vunpack.c.l.b16 %v182
      %v229 = vunpack.c.l.b16 %v183
      %v230 = vunpack.c.l.b16 %v184
      %v231 = vunpack.c.l.b16 %v185
      %v232 = vunpack.c.l.b16 %v186
      %v233 = vunpack.c.l.b16 %v187
      %v234 = vunpack.c.l.b16 %v188
      %v235 = vunpack.c.l.b16 %v189
      %v236 = vunpack.c.l.b16 %v190
      %v237 = vunpack.c.l.b16 %v191
      %v238 = vunpack.c.l.b16 %v192
      %v239 = vunpack.c.l.b16 %v193
      %v240 = vunpack.c.l.b16 %v194
      %v241 = vpack.c.b16 %v223, %v222
      %v242 = vpack.c.b16 %v225, %v224
      %v243 = vpack.c.b16 %v227, %v226
      %v244 = vpack.c.b16 %v229, %v228
      %v245 = vpack.c.b16 %v231, %v230
      %v246 = vpack.c.b16 %v233, %v232
      %v247 = vpack.c.b16 %v235, %v234
      %v248 = vpack.c.b16 %v237, %v236
      %v249 = vpack.c.b16 %v239, %v238
      %v250 = vpack.c.b16 %v240, %v240
      %v255 = vunpack.c.l.b16 %v195
      %v256 = vunpack.c.l.b16 %v196
      %v257 = vunpack.c.l.b16 %v197
      %v258 = vunpack.c.l.b16 %v198
      %v259 = vpack.c.b16 %v256, %v255
      %v260 = vpack.c.b16 %v258, %v257
      %vm263 = vcmask 261120
      %v265 = vsel %vm263, %v241, 0
      %v268 = vsel %vm263, %v242, 0
      %v271 = vsel %vm263, %v243, 0
      %v274 = vsel %vm263, %v244, 0
      %v277 = vsel %vm263, %v245, 0
      %v280 = vsel %vm263, %v246, 0
      %v283 = vsel %vm263, %v247, 0
      %v286 = vsel %vm263, %v248, 0
      %v289 = vsel %vm263, %v249, 0
      %v292 = vsel %vm263, %v250, 0
      %294 = vmatprep.subr.bf16.mxu0 0
      %295 = vmatpush1.bf16.msra.mxu0 %v259
      %296 = vmatprep.subr.bf16.mxu0 0
      %297 = vmatpush1.bf16.msra.mxu0 %v260
      %298 = vmatprep.subr.bf16.mxu0 0
      %299 = vmatpush1.bf16.msra.mxu0 0
      %300 = vmatprep.subr.bf16.mxu0 0
      %301 = vmatpush1.bf16.msra.mxu0 0
      %302 = vmatprep.subr.bf16.mxu0 0
      %303 = vmatpush1.bf16.msra.mxu0 0
      %304 = vmatprep.subr.bf16.mxu0 0
      %305 = vmatpush1.bf16.msra.mxu0 0
      %306 = vmatprep.subr.bf16.mxu0 0
      %307 = vmatpush1.bf16.msra.mxu0 0
      %308 = vmatprep.subr.bf16.mxu0 0
      %309 = vmatpush1.bf16.msra.mxu0 0
      %310 = vmatprep.subr.bf16.mxu0 0
      %311 = vmatpush1.bf16.msra.mxu0 0
      %312 = vmatprep.subr.bf16.mxu0 0
      %313 = vmatpush1.bf16.msra.mxu0 0
      %314 = vmatprep.subr.bf16.mxu0 0
      %315 = vmatpush1.bf16.msra.mxu0 0
      %316 = vmatprep.subr.bf16.mxu0 0
      %317 = vmatpush1.bf16.msra.mxu0 0
      %318 = vmatprep.subr.bf16.mxu0 0
      %319 = vmatpush1.bf16.msra.mxu0 0
      %320 = vmatprep.subr.bf16.mxu0 0
      %321 = vmatpush1.bf16.msra.mxu0 0
      %322 = vmatprep.subr.bf16.mxu0 0
      %323 = vmatpush1.bf16.msra.mxu0 0
      %324 = vmatprep.subr.bf16.mxu0 0
      %325 = vmatpush1.bf16.msra.mxu0 0
      %326 = vmatprep.mubr.bf16.mxu0 0
      %327 = vmatmul.mubr.bf16.gmra.mrb[0].mxu0 %v265
      %v328 = vpop.f32.mrb[0].mxu0
      %v329 = vadd.f32 %v202, %v328
      %v330 = vpop.f32.mrb[0].mxu0
      %v331 = vpop.f32.mrb[0].mxu0
      %v332 = vadd.f32 %v202, %v331
      %v333 = vpop.f32.mrb[0].mxu0
      %334 = vmatprep.mubr.bf16.mxu0 0
      %335 = vmatmul.mubr.bf16.gmra.mrb[0].mxu0 %v268
      %v336 = vpop.f32.mrb[0].mxu0
      %v337 = vadd.f32 %v202, %v336
      %v338 = vpop.f32.mrb[0].mxu0
      %v339 = vpop.f32.mrb[0].mxu0
      %v340 = vadd.f32 %v202, %v339
      %v341 = vpop.f32.mrb[0].mxu0
      %342 = vmatprep.mubr.bf16.mxu0 0
      %343 = vmatmul.mubr.bf16.gmra.mrb[0].mxu0 %v271
      %v344 = vpop.f32.mrb[0].mxu0
      %v345 = vadd.f32 %v202, %v344
      %v346 = vpop.f32.mrb[0].mxu0
      %v347 = vpop.f32.mrb[0].mxu0
      %v348 = vadd.f32 %v202, %v347
      %v349 = vpop.f32.mrb[0].mxu0
      %350 = vmatprep.mubr.bf16.mxu0 0
      %351 = vmatmul.mubr.bf16.gmra.mrb[0].mxu0 %v274
      %v352 = vpop.f32.mrb[0].mxu0
      %v353 = vadd.f32 %v202, %v352
      %v354 = vpop.f32.mrb[0].mxu0
      %v355 = vpop.f32.mrb[0].mxu0
      %v356 = vadd.f32 %v202, %v355
      %v357 = vpop.f32.mrb[0].mxu0
      %358 = vmatprep.mubr.bf16.mxu0 0
      %359 = vmatmul.mubr.bf16.gmra.mrb[0].mxu0 %v277
      %v360 = vpop.f32.mrb[0].mxu0
      %v361 = vadd.f32 %v202, %v360
      %v362 = vpop.f32.mrb[0].mxu0
      %v363 = vpop.f32.mrb[0].mxu0
      %v364 = vadd.f32 %v202, %v363
      %v365 = vpop.f32.mrb[0].mxu0
      %366 = vmatprep.mubr.bf16.mxu0 0
      %367 = vmatmul.mubr.bf16.gmra.mrb[0].mxu0 %v280
      %v368 = vpop.f32.mrb[0].mxu0
      %v369 = vadd.f32 %v202, %v368
      %v370 = vpop.f32.mrb[0].mxu0
      %v371 = vpop.f32.mrb[0].mxu0
      %v372 = vadd.f32 %v202, %v371
      %v373 = vpop.f32.mrb[0].mxu0
      %374 = vmatprep.mubr.bf16.mxu0 0
      %375 = vmatmul.mubr.bf16.gmra.mrb[0].mxu0 %v283
      %v376 = vpop.f32.mrb[0].mxu0
      %v377 = vadd.f32 %v202, %v376
      %v378 = vpop.f32.mrb[0].mxu0
      %v379 = vpop.f32.mrb[0].mxu0
      %v380 = vadd.f32 %v202, %v379
      %v381 = vpop.f32.mrb[0].mxu0
      %382 = vmatprep.mubr.bf16.mxu0 0
      %383 = vmatmul.mubr.bf16.gmra.mrb[0].mxu0 %v286
      %v384 = vpop.f32.mrb[0].mxu0
      %v385 = vadd.f32 %v202, %v384
      %v386 = vpop.f32.mrb[0].mxu0
      %v387 = vpop.f32.mrb[0].mxu0
      %v388 = vadd.f32 %v202, %v387
      %v389 = vpop.f32.mrb[0].mxu0
      %390 = vmatprep.mubr.bf16.mxu0 0
      %391 = vmatmul.mubr.bf16.gmra.mrb[0].mxu0 %v289
      %v392 = vpop.f32.mrb[0].mxu0
      %v393 = vadd.f32 %v202, %v392
      %v394 = vpop.f32.mrb[0].mxu0
      %v395 = vpop.f32.mrb[0].mxu0
      %v396 = vadd.f32 %v202, %v395
      %v397 = vpop.f32.mrb[0].mxu0
      %398 = vmatprep.mubr.bf16.mxu0 0
      %399 = vmatmul.mubr.bf16.gmra.mrb[0].mxu0 %v292
      %v400 = vpop.f32.mrb[0].mxu0
      %v401 = vadd.f32 %v202, %v400
      %v402 = vpop.f32.mrb[0].mxu0
      %v403 = vpop.f32.mrb[0].mxu0
      %v404 = vpop.f32.mrb[0].mxu0
      %405 = vdwg.mxu0
      %v406 = vmul.f32 %v329, 0.5
      %v407 = vmul.f32 %v332, 0.5
      %v408 = vmul.f32 %v337, 0.5
      %v409 = vmul.f32 %v340, 0.5
      %v410 = vmul.f32 %v345, 0.5
      %v411 = vmul.f32 %v348, 0.5
      %v412 = vmul.f32 %v353, 0.5
      %v413 = vmul.f32 %v356, 0.5
      %v414 = vmul.f32 %v361, 0.5
      %v415 = vmul.f32 %v364, 0.5
      %v416 = vmul.f32 %v369, 0.5
      %v417 = vmul.f32 %v372, 0.5
      %v418 = vmul.f32 %v377, 0.5
      %v419 = vmul.f32 %v380, 0.5
      %v420 = vmul.f32 %v385, 0.5
      %v421 = vmul.f32 %v388, 0.5
      %v422 = vmul.f32 %v393, 0.5
      %v423 = vmul.f32 %v396, 0.5
      %v424 = vmul.f32 %v401, 0.5
      %v425 = vtanh.pop %v406
      %v426 = vtanh.pop %v407
      %v427 = vtanh.pop %v408
      %v428 = vtanh.pop %v409
      %v429 = vtanh.pop %v410
      %v430 = vtanh.pop %v411
      %v431 = vtanh.pop %v412
      %v432 = vtanh.pop %v413
      %v433 = vtanh.pop %v414
      %v434 = vtanh.pop %v415
      %v435 = vtanh.pop %v416
      %v436 = vtanh.pop %v417
      %v437 = vtanh.pop %v418
      %v438 = vtanh.pop %v419
      %v439 = vtanh.pop %v420
      %v440 = vtanh.pop %v421
      %v441 = vtanh.pop %v422
      %v442 = vtanh.pop %v423
      %v443 = vtanh.pop %v424
      %v444 = vmul.f32 %v425, 0.5
      %v445 = vmul.f32 %v426, 0.5
      %v446 = vmul.f32 %v427, 0.5
      %v447 = vmul.f32 %v428, 0.5
      %v448 = vmul.f32 %v429, 0.5
      %v449 = vmul.f32 %v430, 0.5
      %v450 = vmul.f32 %v431, 0.5
      %v451 = vmul.f32 %v432, 0.5
      %v452 = vmul.f32 %v433, 0.5
      %v453 = vmul.f32 %v434, 0.5
      %v454 = vmul.f32 %v435, 0.5
      %v455 = vmul.f32 %v436, 0.5
      %v456 = vmul.f32 %v437, 0.5
      %v457 = vmul.f32 %v438, 0.5
      %v458 = vmul.f32 %v439, 0.5
      %v459 = vmul.f32 %v440, 0.5
      %v460 = vmul.f32 %v441, 0.5
      %v461 = vmul.f32 %v442, 0.5
      %v462 = vmul.f32 %v443, 0.5
      %v463 = vadd.f32 %v444, 0.5
      %v464 = vadd.f32 %v445, 0.5
      %v465 = vadd.f32 %v446, 0.5
      %v466 = vadd.f32 %v447, 0.5
      %v467 = vadd.f32 %v448, 0.5
      %v468 = vadd.f32 %v449, 0.5
      %v469 = vadd.f32 %v450, 0.5
      %v470 = vadd.f32 %v451, 0.5
      %v471 = vadd.f32 %v452, 0.5
      %v472 = vadd.f32 %v453, 0.5
      %v473 = vadd.f32 %v454, 0.5
      %v474 = vadd.f32 %v455, 0.5
      %v475 = vadd.f32 %v456, 0.5
      %v476 = vadd.f32 %v457, 0.5
      %v477 = vadd.f32 %v458, 0.5
      %v478 = vadd.f32 %v459, 0.5
      %v479 = vadd.f32 %v460, 0.5
      %v480 = vadd.f32 %v461, 0.5
      %v481 = vadd.f32 %v462, 0.5
      %v482 = vpack.c.bf16 %v464, %v463
      %v483 = vpack.c.bf16 %v466, %v465
      %v484 = vpack.c.bf16 %v468, %v467
      %v485 = vpack.c.bf16 %v470, %v469
      %v486 = vpack.c.bf16 %v472, %v471
      %v487 = vpack.c.bf16 %v474, %v473
      %v488 = vpack.c.bf16 %v476, %v475
      %v489 = vpack.c.bf16 %v478, %v477
      %v490 = vpack.c.bf16 %v480, %v479
      %v491 = vpack.c.bf16 %v481, %v481
      %s492 = scalar_lea.vmem %s1, 64
      %v493 = vld [vmem:[%s492] sm:$0xf]
      %v494 = vld [vmem:[%s492 + $0x4] sm:$0xf]
      %v495 = vld [vmem:[%s492 + $0x8] sm:$0xf]
      %v496 = vld [vmem:[%s492 + $0xc] sm:$0xf]
      %v497 = vld [vmem:[%s492 + $0x10] sm:$0xf]
      %v498 = vld [vmem:[%s492 + $0x14] sm:$0xf]
      %v499 = vld [vmem:[%s492 + $0x18] sm:$0xf]
      %v500 = vld [vmem:[%s492 + $0x1c] sm:$0xf]
      %v501 = vld [vmem:[%s492 + $0x20] sm:$0xf]
      %v502 = vld [vmem:[%s492 + $0x24] sm:$0xf]
      %v503 = vld [vmem:[%s492 + $0x28] sm:$0xf]
      %v504 = vld [vmem:[%s492 + $0x2c] sm:$0xf]
      %v505 = vld [vmem:[%s492 + $0x30] sm:$0xf]
      %v506 = vld [vmem:[%s492 + $0x34] sm:$0xf]
      %v507 = vld [vmem:[%s492 + $0x38] sm:$0xf]
      %v508 = vld [vmem:[%s492 + $0x3c] sm:$0xf]
      %v509 = vlaneseq
      %v510 = vshrl.u32 %v509, 7
      %v511 = vsub.s32 1, %v510
      %v512 = vrot.slane %v175, %v511
      %v529 = vunpack.c.l.b16 %v493
      %v530 = vunpack.c.l.b16 %v494
      %v531 = vunpack.c.l.b16 %v495
      %v532 = vunpack.c.l.b16 %v496
      %v533 = vunpack.c.l.b16 %v497
      %v534 = vunpack.c.l.b16 %v498
      %v535 = vunpack.c.l.b16 %v499
      %v536 = vunpack.c.l.b16 %v500
      %v537 = vunpack.c.l.b16 %v501
      %v538 = vunpack.c.l.b16 %v502
      %v539 = vunpack.c.l.b16 %v503
      %v540 = vunpack.c.l.b16 %v504
      %v541 = vunpack.c.l.b16 %v505
      %v542 = vunpack.c.l.b16 %v506
      %v543 = vunpack.c.l.b16 %v507
      %v544 = vunpack.c.l.b16 %v508
      %v545 = vpack.c.b16 %v530, %v529
      %v546 = vpack.c.b16 %v532, %v531
      %v547 = vpack.c.b16 %v534, %v533
      %v548 = vpack.c.b16 %v536, %v535
      %v549 = vpack.c.b16 %v538, %v537
      %v550 = vpack.c.b16 %v540, %v539
      %v551 = vpack.c.b16 %v542, %v541
      %v552 = vpack.c.b16 %v544, %v543
      %561 = vmatprep.subr.bf16.mxu0 0
      %562 = vmatpush1.bf16.msra.mxu0 %v545
      %563 = vmatprep.subr.bf16.mxu0 0
      %564 = vmatpush1.bf16.msra.mxu0 %v546
      %565 = vmatprep.subr.bf16.mxu0 0
      %566 = vmatpush1.bf16.msra.mxu0 %v547
      %567 = vmatprep.subr.bf16.mxu0 0
      %568 = vmatpush1.bf16.msra.mxu0 %v548
      %569 = vmatprep.subr.bf16.mxu0 0
      %570 = vmatpush1.bf16.msra.mxu0 %v549
      %571 = vmatprep.subr.bf16.mxu0 0
      %572 = vmatpush1.bf16.msra.mxu0 %v550
      %573 = vmatprep.subr.bf16.mxu0 0
      %574 = vmatpush1.bf16.msra.mxu0 %v551
      %575 = vmatprep.subr.bf16.mxu0 0
      %576 = vmatpush1.bf16.msra.mxu0 %v552
      %577 = vmatprep.subr.bf16.mxu0 0
      %578 = vmatpush1.bf16.msra.mxu0 0
      %579 = vmatprep.subr.bf16.mxu0 0
      %580 = vmatpush1.bf16.msra.mxu0 0
      %581 = vmatprep.subr.bf16.mxu0 0
      %582 = vmatpush1.bf16.msra.mxu0 0
      %583 = vmatprep.subr.bf16.mxu0 0
      %584 = vmatpush1.bf16.msra.mxu0 0
      %585 = vmatprep.subr.bf16.mxu0 0
      %586 = vmatpush1.bf16.msra.mxu0 0
      %587 = vmatprep.subr.bf16.mxu0 0
      %588 = vmatpush1.bf16.msra.mxu0 0
      %589 = vmatprep.subr.bf16.mxu0 0
      %590 = vmatpush1.bf16.msra.mxu0 0
      %591 = vmatprep.subr.bf16.mxu0 0
      %592 = vmatpush1.bf16.msra.mxu0 0
      %593 = vmatprep.mubr.bf16.mxu0 0
      %594 = vmatmul.mubr.bf16.gmra.mrb[0].mxu0 %v482
      %v595 = vpop.f32.mrb[0].mxu0
      %v596 = vadd.f32 %v512, %v595
      %v597 = vpop.f32.mrb[0].mxu0
      %v598 = vpop.f32.mrb[0].mxu0
      %v599 = vadd.f32 %v512, %v598
      %v600 = vpop.f32.mrb[0].mxu0
      %601 = vmatprep.mubr.bf16.mxu0 0
      %602 = vmatmul.mubr.bf16.gmra.mrb[0].mxu0 %v483
      %v603 = vpop.f32.mrb[0].mxu0
      %v604 = vadd.f32 %v512, %v603
      %v605 = vpop.f32.mrb[0].mxu0
      %v606 = vpop.f32.mrb[0].mxu0
      %v607 = vadd.f32 %v512, %v606
      %v608 = vpop.f32.mrb[0].mxu0
      %609 = vmatprep.mubr.bf16.mxu0 0
      %610 = vmatmul.mubr.bf16.gmra.mrb[0].mxu0 %v484
      %v611 = vpop.f32.mrb[0].mxu0
      %v612 = vadd.f32 %v512, %v611
      %v613 = vpop.f32.mrb[0].mxu0
      %v614 = vpop.f32.mrb[0].mxu0
      %v615 = vadd.f32 %v512, %v614
      %v616 = vpop.f32.mrb[0].mxu0
      %617 = vmatprep.mubr.bf16.mxu0 0
      %618 = vmatmul.mubr.bf16.gmra.mrb[0].mxu0 %v485
      %v619 = vpop.f32.mrb[0].mxu0
      %v620 = vadd.f32 %v512, %v619
      %v621 = vpop.f32.mrb[0].mxu0
      %v622 = vpop.f32.mrb[0].mxu0
      %v623 = vadd.f32 %v512, %v622
      %v624 = vpop.f32.mrb[0].mxu0
      %625 = vmatprep.mubr.bf16.mxu0 0
      %626 = vmatmul.mubr.bf16.gmra.mrb[0].mxu0 %v486
      %v627 = vpop.f32.mrb[0].mxu0
      %v628 = vadd.f32 %v512, %v627
      %v629 = vpop.f32.mrb[0].mxu0
      %v630 = vpop.f32.mrb[0].mxu0
      %v631 = vadd.f32 %v512, %v630
      %v632 = vpop.f32.mrb[0].mxu0
      %633 = vmatprep.mubr.bf16.mxu0 0
      %634 = vmatmul.mubr.bf16.gmra.mrb[0].mxu0 %v487
      %v635 = vpop.f32.mrb[0].mxu0
      %v636 = vadd.f32 %v512, %v635
      %v637 = vpop.f32.mrb[0].mxu0
      %v638 = vpop.f32.mrb[0].mxu0
      %v639 = vadd.f32 %v512, %v638
      %v640 = vpop.f32.mrb[0].mxu0
      %641 = vmatprep.mubr.bf16.mxu0 0
      %642 = vmatmul.mubr.bf16.gmra.mrb[0].mxu0 %v488
      %v643 = vpop.f32.mrb[0].mxu0
      %v644 = vadd.f32 %v512, %v643
      %v645 = vpop.f32.mrb[0].mxu0
      %v646 = vpop.f32.mrb[0].mxu0
      %v647 = vadd.f32 %v512, %v646
      %v648 = vpop.f32.mrb[0].mxu0
      %649 = vmatprep.mubr.bf16.mxu0 0
      %650 = vmatmul.mubr.bf16.gmra.mrb[0].mxu0 %v489
      %v651 = vpop.f32.mrb[0].mxu0
      %v652 = vadd.f32 %v512, %v651
      %v653 = vpop.f32.mrb[0].mxu0
      %v654 = vpop.f32.mrb[0].mxu0
      %v655 = vadd.f32 %v512, %v654
      %v656 = vpop.f32.mrb[0].mxu0
      %657 = vmatprep.mubr.bf16.mxu0 0
      %658 = vmatmul.mubr.bf16.gmra.mrb[0].mxu0 %v490
      %v659 = vpop.f32.mrb[0].mxu0
      %v660 = vadd.f32 %v512, %v659
      %v661 = vpop.f32.mrb[0].mxu0
      %v662 = vpop.f32.mrb[0].mxu0
      %v663 = vadd.f32 %v512, %v662
      %v664 = vpop.f32.mrb[0].mxu0
      %665 = vmatprep.mubr.bf16.mxu0 0
      %666 = vmatmul.mubr.bf16.gmra.mrb[0].mxu0 %v491
      %v667 = vpop.f32.mrb[0].mxu0
      %v668 = vadd.f32 %v512, %v667
      %v669 = vpop.f32.mrb[0].mxu0
      %v670 = vpop.f32.mrb[0].mxu0
      %v671 = vpop.f32.mrb[0].mxu0
      %672 = vdwg.mxu0
      %v673 = vmul.f32 %v596, 0.5
      %v674 = vmul.f32 %v599, 0.5
      %v675 = vmul.f32 %v604, 0.5
      %v676 = vmul.f32 %v607, 0.5
      %v677 = vmul.f32 %v612, 0.5
      %v678 = vmul.f32 %v615, 0.5
      %v679 = vmul.f32 %v620, 0.5
      %v680 = vmul.f32 %v623, 0.5
      %v681 = vmul.f32 %v628, 0.5
      %v682 = vmul.f32 %v631, 0.5
      %v683 = vmul.f32 %v636, 0.5
      %v684 = vmul.f32 %v639, 0.5
      %v685 = vmul.f32 %v644, 0.5
      %v686 = vmul.f32 %v647, 0.5
      %v687 = vmul.f32 %v652, 0.5
      %v688 = vmul.f32 %v655, 0.5
      %v689 = vmul.f32 %v660, 0.5
      %v690 = vmul.f32 %v663, 0.5
      %v691 = vmul.f32 %v668, 0.5
      %v692 = vtanh.pop %v673
      %v693 = vtanh.pop %v674
      %v694 = vtanh.pop %v675
      %v695 = vtanh.pop %v676
      %v696 = vtanh.pop %v677
      %v697 = vtanh.pop %v678
      %v698 = vtanh.pop %v679
      %v699 = vtanh.pop %v680
      %v700 = vtanh.pop %v681
      %v701 = vtanh.pop %v682
      %v702 = vtanh.pop %v683
      %v703 = vtanh.pop %v684
      %v704 = vtanh.pop %v685
      %v705 = vtanh.pop %v686
      %v706 = vtanh.pop %v687
      %v707 = vtanh.pop %v688
      %v708 = vtanh.pop %v689
      %v709 = vtanh.pop %v690
      %v710 = vtanh.pop %v691
      %v711 = vmul.f32 %v692, 0.5
      %v712 = vmul.f32 %v693, 0.5
      %v713 = vmul.f32 %v694, 0.5
      %v714 = vmul.f32 %v695, 0.5
      %v715 = vmul.f32 %v696, 0.5
      %v716 = vmul.f32 %v697, 0.5
      %v717 = vmul.f32 %v698, 0.5
      %v718 = vmul.f32 %v699, 0.5
      %v719 = vmul.f32 %v700, 0.5
      %v720 = vmul.f32 %v701, 0.5
      %v721 = vmul.f32 %v702, 0.5
      %v722 = vmul.f32 %v703, 0.5
      %v723 = vmul.f32 %v704, 0.5
      %v724 = vmul.f32 %v705, 0.5
      %v725 = vmul.f32 %v706, 0.5
      %v726 = vmul.f32 %v707, 0.5
      %v727 = vmul.f32 %v708, 0.5
      %v728 = vmul.f32 %v709, 0.5
      %v729 = vmul.f32 %v710, 0.5
      %v730 = vadd.f32 %v711, 0.5
      %v731 = vadd.f32 %v712, 0.5
      %v732 = vadd.f32 %v713, 0.5
      %v733 = vadd.f32 %v714, 0.5
      %v734 = vadd.f32 %v715, 0.5
      %v735 = vadd.f32 %v716, 0.5
      %v736 = vadd.f32 %v717, 0.5
      %v737 = vadd.f32 %v718, 0.5
      %v738 = vadd.f32 %v719, 0.5
      %v739 = vadd.f32 %v720, 0.5
      %v740 = vadd.f32 %v721, 0.5
      %v741 = vadd.f32 %v722, 0.5
      %v742 = vadd.f32 %v723, 0.5
      %v743 = vadd.f32 %v724, 0.5
      %v744 = vadd.f32 %v725, 0.5
      %v745 = vadd.f32 %v726, 0.5
      %v746 = vadd.f32 %v727, 0.5
      %v747 = vadd.f32 %v728, 0.5
      %v748 = vadd.f32 %v729, 0.5
      %v749 = vpack.c.bf16 %v731, %v730
      %v750 = vpack.c.bf16 %v733, %v732
      %v751 = vpack.c.bf16 %v735, %v734
      %v752 = vpack.c.bf16 %v737, %v736
      %v753 = vpack.c.bf16 %v739, %v738
      %v754 = vpack.c.bf16 %v741, %v740
      %v755 = vpack.c.bf16 %v743, %v742
      %v756 = vpack.c.bf16 %v745, %v744
      %v757 = vpack.c.bf16 %v747, %v746
      %v758 = vpack.c.bf16 %v748, %v748
      %s759 = scalar_lea.vmem %s1, 128
      %v760 = vld [vmem:[%s759] sm:$0xf]
      %v761 = vld [vmem:[%s759 + $0x4] sm:$0xf]
      %v762 = vld [vmem:[%s759 + $0x8] sm:$0xf]
      %v763 = vld [vmem:[%s759 + $0xc] sm:$0xf]
      %v764 = vld [vmem:[%s759 + $0x10] sm:$0xf]
      %v765 = vld [vmem:[%s759 + $0x14] sm:$0xf]
      %v766 = vld [vmem:[%s759 + $0x18] sm:$0xf]
      %v767 = vld [vmem:[%s759 + $0x1c] sm:$0xf]
      %v768 = vld [vmem:[%s759 + $0x20] sm:$0xf]
      %v769 = vld [vmem:[%s759 + $0x24] sm:$0xf]
      %v770 = vld [vmem:[%s759 + $0x28] sm:$0xf]
      %v771 = vld [vmem:[%s759 + $0x2c] sm:$0xf]
      %v772 = vld [vmem:[%s759 + $0x30] sm:$0xf]
      %v773 = vld [vmem:[%s759 + $0x34] sm:$0xf]
      %v774 = vld [vmem:[%s759 + $0x38] sm:$0xf]
      %v775 = vld [vmem:[%s759 + $0x3c] sm:$0xf]
      %v776 = vlaneseq
      %v777 = vshrl.u32 %v776, 7
      %v778 = vsub.s32 2, %v777
      %v779 = vrot.slane %v175, %v778
      %v796 = vunpack.c.l.b16 %v760
      %v797 = vunpack.c.l.b16 %v761
      %v798 = vunpack.c.l.b16 %v762
      %v799 = vunpack.c.l.b16 %v763
      %v800 = vunpack.c.l.b16 %v764
      %v801 = vunpack.c.l.b16 %v765
      %v802 = vunpack.c.l.b16 %v766
      %v803 = vunpack.c.l.b16 %v767
      %v804 = vunpack.c.l.b16 %v768
      %v805 = vunpack.c.l.b16 %v769
      %v806 = vunpack.c.l.b16 %v770
      %v807 = vunpack.c.l.b16 %v771
      %v808 = vunpack.c.l.b16 %v772
      %v809 = vunpack.c.l.b16 %v773
      %v810 = vunpack.c.l.b16 %v774
      %v811 = vunpack.c.l.b16 %v775
      %v812 = vpack.c.b16 %v797, %v796
      %v813 = vpack.c.b16 %v799, %v798
      %v814 = vpack.c.b16 %v801, %v800
      %v815 = vpack.c.b16 %v803, %v802
      %v816 = vpack.c.b16 %v805, %v804
      %v817 = vpack.c.b16 %v807, %v806
      %v818 = vpack.c.b16 %v809, %v808
      %v819 = vpack.c.b16 %v811, %v810
      %828 = vmatprep.subr.bf16.mxu0 0
      %829 = vmatpush1.bf16.msra.mxu0 %v812
      %830 = vmatprep.subr.bf16.mxu0 0
      %831 = vmatpush1.bf16.msra.mxu0 %v813
      %832 = vmatprep.subr.bf16.mxu0 0
      %833 = vmatpush1.bf16.msra.mxu0 %v814
      %834 = vmatprep.subr.bf16.mxu0 0
      %835 = vmatpush1.bf16.msra.mxu0 %v815
      %836 = vmatprep.subr.bf16.mxu0 0
      %837 = vmatpush1.bf16.msra.mxu0 %v816
      %838 = vmatprep.subr.bf16.mxu0 0
      %839 = vmatpush1.bf16.msra.mxu0 %v817
      %840 = vmatprep.subr.bf16.mxu0 0
      %841 = vmatpush1.bf16.msra.mxu0 %v818
      %842 = vmatprep.subr.bf16.mxu0 0
      %843 = vmatpush1.bf16.msra.mxu0 %v819
      %844 = vmatprep.subr.bf16.mxu0 0
      %845 = vmatpush1.bf16.msra.mxu0 0
      %846 = vmatprep.subr.bf16.mxu0 0
      %847 = vmatpush1.bf16.msra.mxu0 0
      %848 = vmatprep.subr.bf16.mxu0 0
      %849 = vmatpush1.bf16.msra.mxu0 0
      %850 = vmatprep.subr.bf16.mxu0 0
      %851 = vmatpush1.bf16.msra.mxu0 0
      %852 = vmatprep.subr.bf16.mxu0 0
      %853 = vmatpush1.bf16.msra.mxu0 0
      %854 = vmatprep.subr.bf16.mxu0 0
      %855 = vmatpush1.bf16.msra.mxu0 0
      %856 = vmatprep.subr.bf16.mxu0 0
      %857 = vmatpush1.bf16.msra.mxu0 0
      %858 = vmatprep.subr.bf16.mxu0 0
      %859 = vmatpush1.bf16.msra.mxu0 0
      %860 = vmatprep.mubr.bf16.mxu0 0
      %861 = vmatmul.mubr.bf16.gmra.mrb[0].mxu0 %v749
      %v862 = vpop.f32.mrb[0].mxu0
      %v863 = vadd.f32 %v779, %v862
      %v864 = vpop.f32.mrb[0].mxu0
      %v865 = vpop.f32.mrb[0].mxu0
      %v866 = vadd.f32 %v779, %v865
      %v867 = vpop.f32.mrb[0].mxu0
      %868 = vmatprep.mubr.bf16.mxu0 0
      %869 = vmatmul.mubr.bf16.gmra.mrb[0].mxu0 %v750
      %v870 = vpop.f32.mrb[0].mxu0
      %v871 = vadd.f32 %v779, %v870
      %v872 = vpop.f32.mrb[0].mxu0
      %v873 = vpop.f32.mrb[0].mxu0
      %v874 = vadd.f32 %v779, %v873
      %v875 = vpop.f32.mrb[0].mxu0
      %876 = vmatprep.mubr.bf16.mxu0 0
      %877 = vmatmul.mubr.bf16.gmra.mrb[0].mxu0 %v751
      %v878 = vpop.f32.mrb[0].mxu0
      %v879 = vadd.f32 %v779, %v878
      %v880 = vpop.f32.mrb[0].mxu0
      %v881 = vpop.f32.mrb[0].mxu0
      %v882 = vadd.f32 %v779, %v881
      %v883 = vpop.f32.mrb[0].mxu0
      %884 = vmatprep.mubr.bf16.mxu0 0
      %885 = vmatmul.mubr.bf16.gmra.mrb[0].mxu0 %v752
      %v886 = vpop.f32.mrb[0].mxu0
      %v887 = vadd.f32 %v779, %v886
      %v888 = vpop.f32.mrb[0].mxu0
      %v889 = vpop.f32.mrb[0].mxu0
      %v890 = vadd.f32 %v779, %v889
      %v891 = vpop.f32.mrb[0].mxu0
      %892 = vmatprep.mubr.bf16.mxu0 0
      %893 = vmatmul.mubr.bf16.gmra.mrb[0].mxu0 %v753
      %v894 = vpop.f32.mrb[0].mxu0
      %v895 = vadd.f32 %v779, %v894
      %v896 = vpop.f32.mrb[0].mxu0
      %v897 = vpop.f32.mrb[0].mxu0
      %v898 = vadd.f32 %v779, %v897
      %v899 = vpop.f32.mrb[0].mxu0
      %900 = vmatprep.mubr.bf16.mxu0 0
      %901 = vmatmul.mubr.bf16.gmra.mrb[0].mxu0 %v754
      %v902 = vpop.f32.mrb[0].mxu0
      %v903 = vadd.f32 %v779, %v902
      %v904 = vpop.f32.mrb[0].mxu0
      %v905 = vpop.f32.mrb[0].mxu0
      %v906 = vadd.f32 %v779, %v905
      %v907 = vpop.f32.mrb[0].mxu0
      %908 = vmatprep.mubr.bf16.mxu0 0
      %909 = vmatmul.mubr.bf16.gmra.mrb[0].mxu0 %v755
      %v910 = vpop.f32.mrb[0].mxu0
      %v911 = vadd.f32 %v779, %v910
      %v912 = vpop.f32.mrb[0].mxu0
      %v913 = vpop.f32.mrb[0].mxu0
      %v914 = vadd.f32 %v779, %v913
      %v915 = vpop.f32.mrb[0].mxu0
      %916 = vmatprep.mubr.bf16.mxu0 0
      %917 = vmatmul.mubr.bf16.gmra.mrb[0].mxu0 %v756
      %v918 = vpop.f32.mrb[0].mxu0
      %v919 = vadd.f32 %v779, %v918
      %v920 = vpop.f32.mrb[0].mxu0
      %v921 = vpop.f32.mrb[0].mxu0
      %v922 = vadd.f32 %v779, %v921
      %v923 = vpop.f32.mrb[0].mxu0
      %924 = vmatprep.mubr.bf16.mxu0 0
      %925 = vmatmul.mubr.bf16.gmra.mrb[0].mxu0 %v757
      %v926 = vpop.f32.mrb[0].mxu0
      %v927 = vadd.f32 %v779, %v926
      %v928 = vpop.f32.mrb[0].mxu0
      %v929 = vpop.f32.mrb[0].mxu0
      %v930 = vadd.f32 %v779, %v929
      %v931 = vpop.f32.mrb[0].mxu0
      %932 = vmatprep.mubr.bf16.mxu0 0
      %933 = vmatmul.mubr.bf16.gmra.mrb[0].mxu0 %v758
      %v934 = vpop.f32.mrb[0].mxu0
      %v935 = vadd.f32 %v779, %v934
      %v936 = vpop.f32.mrb[0].mxu0
      %v937 = vpop.f32.mrb[0].mxu0
      %v938 = vpop.f32.mrb[0].mxu0
      %939 = vdwg.mxu0
      %v940 = vmul.f32 %v863, 0.5
      %v941 = vmul.f32 %v866, 0.5
      %v942 = vmul.f32 %v871, 0.5
      %v943 = vmul.f32 %v874, 0.5
      %v944 = vmul.f32 %v879, 0.5
      %v945 = vmul.f32 %v882, 0.5
      %v946 = vmul.f32 %v887, 0.5
      %v947 = vmul.f32 %v890, 0.5
      %v948 = vmul.f32 %v895, 0.5
      %v949 = vmul.f32 %v898, 0.5
      %v950 = vmul.f32 %v903, 0.5
      %v951 = vmul.f32 %v906, 0.5
      %v952 = vmul.f32 %v911, 0.5
      %v953 = vmul.f32 %v914, 0.5
      %v954 = vmul.f32 %v919, 0.5
      %v955 = vmul.f32 %v922, 0.5
      %v956 = vmul.f32 %v927, 0.5
      %v957 = vmul.f32 %v930, 0.5
      %v958 = vmul.f32 %v935, 0.5
      %v959 = vtanh.pop %v940
      %v960 = vtanh.pop %v941
      %v961 = vtanh.pop %v942
      %v962 = vtanh.pop %v943
      %v963 = vtanh.pop %v944
      %v964 = vtanh.pop %v945
      %v965 = vtanh.pop %v946
      %v966 = vtanh.pop %v947
      %v967 = vtanh.pop %v948
      %v968 = vtanh.pop %v949
      %v969 = vtanh.pop %v950
      %v970 = vtanh.pop %v951
      %v971 = vtanh.pop %v952
      %v972 = vtanh.pop %v953
      %v973 = vtanh.pop %v954
      %v974 = vtanh.pop %v955
      %v975 = vtanh.pop %v956
      %v976 = vtanh.pop %v957
      %v977 = vtanh.pop %v958
      %v978 = vmul.f32 %v959, 0.5
      %v979 = vmul.f32 %v960, 0.5
      %v980 = vmul.f32 %v961, 0.5
      %v981 = vmul.f32 %v962, 0.5
      %v982 = vmul.f32 %v963, 0.5
      %v983 = vmul.f32 %v964, 0.5
      %v984 = vmul.f32 %v965, 0.5
      %v985 = vmul.f32 %v966, 0.5
      %v986 = vmul.f32 %v967, 0.5
      %v987 = vmul.f32 %v968, 0.5
      %v988 = vmul.f32 %v969, 0.5
      %v989 = vmul.f32 %v970, 0.5
      %v990 = vmul.f32 %v971, 0.5
      %v991 = vmul.f32 %v972, 0.5
      %v992 = vmul.f32 %v973, 0.5
      %v993 = vmul.f32 %v974, 0.5
      %v994 = vmul.f32 %v975, 0.5
      %v995 = vmul.f32 %v976, 0.5
      %v996 = vmul.f32 %v977, 0.5
      %v997 = vadd.f32 %v978, 0.5
      %v998 = vadd.f32 %v979, 0.5
      %v999 = vadd.f32 %v980, 0.5
      %v1000 = vadd.f32 %v981, 0.5
      %v1001 = vadd.f32 %v982, 0.5
      %v1002 = vadd.f32 %v983, 0.5
      %v1003 = vadd.f32 %v984, 0.5
      %v1004 = vadd.f32 %v985, 0.5
      %v1005 = vadd.f32 %v986, 0.5
      %v1006 = vadd.f32 %v987, 0.5
      %v1007 = vadd.f32 %v988, 0.5
      %v1008 = vadd.f32 %v989, 0.5
      %v1009 = vadd.f32 %v990, 0.5
      %v1010 = vadd.f32 %v991, 0.5
      %v1011 = vadd.f32 %v992, 0.5
      %v1012 = vadd.f32 %v993, 0.5
      %v1013 = vadd.f32 %v994, 0.5
      %v1014 = vadd.f32 %v995, 0.5
      %v1015 = vadd.f32 %v996, 0.5
      %v1016 = vpack.c.bf16 %v998, %v997
      %v1017 = vpack.c.bf16 %v1000, %v999
      %v1018 = vpack.c.bf16 %v1002, %v1001
      %v1019 = vpack.c.bf16 %v1004, %v1003
      %v1020 = vpack.c.bf16 %v1006, %v1005
      %v1021 = vpack.c.bf16 %v1008, %v1007
      %v1022 = vpack.c.bf16 %v1010, %v1009
      %v1023 = vpack.c.bf16 %v1012, %v1011
      %v1024 = vpack.c.bf16 %v1014, %v1013
      %v1025 = vpack.c.bf16 %v1015, %v1015
      %s1026 = scalar_lea.vmem %s1, 192
      %v1027 = vld [vmem:[%s1026] sm:$0xf]
      %v1028 = vld [vmem:[%s1026 + $0x4] sm:$0xf]
      %v1029 = vld [vmem:[%s1026 + $0x8] sm:$0xf]
      %v1030 = vld [vmem:[%s1026 + $0xc] sm:$0xf]
      %v1031 = vld [vmem:[%s1026 + $0x10] sm:$0xf]
      %v1032 = vld [vmem:[%s1026 + $0x14] sm:$0xf]
      %v1033 = vld [vmem:[%s1026 + $0x18] sm:$0xf]
      %v1034 = vld [vmem:[%s1026 + $0x1c] sm:$0xf]
      %v1035 = vld [vmem:[%s1026 + $0x20] sm:$0xf]
      %v1036 = vld [vmem:[%s1026 + $0x24] sm:$0xf]
      %v1037 = vld [vmem:[%s1026 + $0x28] sm:$0xf]
      %v1038 = vld [vmem:[%s1026 + $0x2c] sm:$0xf]
      %v1039 = vld [vmem:[%s1026 + $0x30] sm:$0xf]
      %v1040 = vld [vmem:[%s1026 + $0x34] sm:$0xf]
      %v1041 = vld [vmem:[%s1026 + $0x38] sm:$0xf]
      %v1042 = vld [vmem:[%s1026 + $0x3c] sm:$0xf]
      %v1043 = vlaneseq
      %v1044 = vshrl.u32 %v1043, 7
      %v1045 = vsub.s32 3, %v1044
      %v1046 = vrot.slane %v175, %v1045
      %v1063 = vunpack.c.l.b16 %v1027
      %v1064 = vunpack.c.l.b16 %v1028
      %v1065 = vunpack.c.l.b16 %v1029
      %v1066 = vunpack.c.l.b16 %v1030
      %v1067 = vunpack.c.l.b16 %v1031
      %v1068 = vunpack.c.l.b16 %v1032
      %v1069 = vunpack.c.l.b16 %v1033
      %v1070 = vunpack.c.l.b16 %v1034
      %v1071 = vunpack.c.l.b16 %v1035
      %v1072 = vunpack.c.l.b16 %v1036
      %v1073 = vunpack.c.l.b16 %v1037
      %v1074 = vunpack.c.l.b16 %v1038
      %v1075 = vunpack.c.l.b16 %v1039
      %v1076 = vunpack.c.l.b16 %v1040
      %v1077 = vunpack.c.l.b16 %v1041
      %v1078 = vunpack.c.l.b16 %v1042
      %v1079 = vpack.c.b16 %v1064, %v1063
      %v1080 = vpack.c.b16 %v1066, %v1065
      %v1081 = vpack.c.b16 %v1068, %v1067
      %v1082 = vpack.c.b16 %v1070, %v1069
      %v1083 = vpack.c.b16 %v1072, %v1071
      %v1084 = vpack.c.b16 %v1074, %v1073
      %v1085 = vpack.c.b16 %v1076, %v1075
      %v1086 = vpack.c.b16 %v1078, %v1077
      %1095 = vmatprep.subr.bf16.mxu0 0
      %1096 = vmatpush1.bf16.msra.mxu0 %v1079
      %1097 = vmatprep.subr.bf16.mxu0 0
      %1098 = vmatpush1.bf16.msra.mxu0 %v1080
      %1099 = vmatprep.subr.bf16.mxu0 0
      %1100 = vmatpush1.bf16.msra.mxu0 %v1081
      %1101 = vmatprep.subr.bf16.mxu0 0
      %1102 = vmatpush1.bf16.msra.mxu0 %v1082
      %1103 = vmatprep.subr.bf16.mxu0 0
      %1104 = vmatpush1.bf16.msra.mxu0 %v1083
      %1105 = vmatprep.subr.bf16.mxu0 0
      %1106 = vmatpush1.bf16.msra.mxu0 %v1084
      %1107 = vmatprep.subr.bf16.mxu0 0
      %1108 = vmatpush1.bf16.msra.mxu0 %v1085
      %1109 = vmatprep.subr.bf16.mxu0 0
      %1110 = vmatpush1.bf16.msra.mxu0 %v1086
      %1111 = vmatprep.subr.bf16.mxu0 0
      %1112 = vmatpush1.bf16.msra.mxu0 0
      %1113 = vmatprep.subr.bf16.mxu0 0
      %1114 = vmatpush1.bf16.msra.mxu0 0
      %1115 = vmatprep.subr.bf16.mxu0 0
      %1116 = vmatpush1.bf16.msra.mxu0 0
      %1117 = vmatprep.subr.bf16.mxu0 0
      %1118 = vmatpush1.bf16.msra.mxu0 0
      %1119 = vmatprep.subr.bf16.mxu0 0
      %1120 = vmatpush1.bf16.msra.mxu0 0
      %1121 = vmatprep.subr.bf16.mxu0 0
      %1122 = vmatpush1.bf16.msra.mxu0 0
      %1123 = vmatprep.subr.bf16.mxu0 0
      %1124 = vmatpush1.bf16.msra.mxu0 0
      %1125 = vmatprep.subr.bf16.mxu0 0
      %1126 = vmatpush1.bf16.msra.mxu0 0
      %1127 = vmatprep.mubr.bf16.mxu0 0
      %1128 = vmatmul.mubr.bf16.gmra.mrb[0].mxu0 %v1016
      %v1129 = vpop.f32.mrb[0].mxu0
      %v1130 = vadd.f32 %v1046, %v1129
      %v1131 = vpop.f32.mrb[0].mxu0
      %v1132 = vpop.f32.mrb[0].mxu0
      %v1133 = vadd.f32 %v1046, %v1132
      %v1134 = vpop.f32.mrb[0].mxu0
      %1135 = vmatprep.mubr.bf16.mxu0 0
      %1136 = vmatmul.mubr.bf16.gmra.mrb[0].mxu0 %v1017
      %v1137 = vpop.f32.mrb[0].mxu0
      %v1138 = vadd.f32 %v1046, %v1137
      %v1139 = vpop.f32.mrb[0].mxu0
      %v1140 = vpop.f32.mrb[0].mxu0
      %v1141 = vadd.f32 %v1046, %v1140
      %v1142 = vpop.f32.mrb[0].mxu0
      %1143 = vmatprep.mubr.bf16.mxu0 0
      %1144 = vmatmul.mubr.bf16.gmra.mrb[0].mxu0 %v1018
      %v1145 = vpop.f32.mrb[0].mxu0
      %v1146 = vadd.f32 %v1046, %v1145
      %v1147 = vpop.f32.mrb[0].mxu0
      %v1148 = vpop.f32.mrb[0].mxu0
      %v1149 = vadd.f32 %v1046, %v1148
      %v1150 = vpop.f32.mrb[0].mxu0
      %1151 = vmatprep.mubr.bf16.mxu0 0
      %1152 = vmatmul.mubr.bf16.gmra.mrb[0].mxu0 %v1019
      %v1153 = vpop.f32.mrb[0].mxu0
      %v1154 = vadd.f32 %v1046, %v1153
      %v1155 = vpop.f32.mrb[0].mxu0
      %v1156 = vpop.f32.mrb[0].mxu0
      %v1157 = vadd.f32 %v1046, %v1156
      %v1158 = vpop.f32.mrb[0].mxu0
      %1159 = vmatprep.mubr.bf16.mxu0 0
      %1160 = vmatmul.mubr.bf16.gmra.mrb[0].mxu0 %v1020
      %v1161 = vpop.f32.mrb[0].mxu0
      %v1162 = vadd.f32 %v1046, %v1161
      %v1163 = vpop.f32.mrb[0].mxu0
      %v1164 = vpop.f32.mrb[0].mxu0
      %v1165 = vadd.f32 %v1046, %v1164
      %v1166 = vpop.f32.mrb[0].mxu0
      %1167 = vmatprep.mubr.bf16.mxu0 0
      %1168 = vmatmul.mubr.bf16.gmra.mrb[0].mxu0 %v1021
      %v1169 = vpop.f32.mrb[0].mxu0
      %v1170 = vadd.f32 %v1046, %v1169
      %v1171 = vpop.f32.mrb[0].mxu0
      %v1172 = vpop.f32.mrb[0].mxu0
      %v1173 = vadd.f32 %v1046, %v1172
      %v1174 = vpop.f32.mrb[0].mxu0
      %1175 = vmatprep.mubr.bf16.mxu0 0
      %1176 = vmatmul.mubr.bf16.gmra.mrb[0].mxu0 %v1022
      %v1177 = vpop.f32.mrb[0].mxu0
      %v1178 = vadd.f32 %v1046, %v1177
      %v1179 = vpop.f32.mrb[0].mxu0
      %v1180 = vpop.f32.mrb[0].mxu0
      %v1181 = vadd.f32 %v1046, %v1180
      %v1182 = vpop.f32.mrb[0].mxu0
      %1183 = vmatprep.mubr.bf16.mxu0 0
      %1184 = vmatmul.mubr.bf16.gmra.mrb[0].mxu0 %v1023
      %v1185 = vpop.f32.mrb[0].mxu0
      %v1186 = vadd.f32 %v1046, %v1185
      %v1187 = vpop.f32.mrb[0].mxu0
      %v1188 = vpop.f32.mrb[0].mxu0
      %v1189 = vadd.f32 %v1046, %v1188
      %v1190 = vpop.f32.mrb[0].mxu0
      %1191 = vmatprep.mubr.bf16.mxu0 0
      %1192 = vmatmul.mubr.bf16.gmra.mrb[0].mxu0 %v1024
      %v1193 = vpop.f32.mrb[0].mxu0
      %v1194 = vadd.f32 %v1046, %v1193
      %v1195 = vpop.f32.mrb[0].mxu0
      %v1196 = vpop.f32.mrb[0].mxu0
      %v1197 = vadd.f32 %v1046, %v1196
      %v1198 = vpop.f32.mrb[0].mxu0
      %1199 = vmatprep.mubr.bf16.mxu0 0
      %1200 = vmatmul.mubr.bf16.gmra.mrb[0].mxu0 %v1025
      %v1201 = vpop.f32.mrb[0].mxu0
      %v1202 = vadd.f32 %v1046, %v1201
      %v1203 = vpop.f32.mrb[0].mxu0
      %v1204 = vpop.f32.mrb[0].mxu0
      %v1205 = vpop.f32.mrb[0].mxu0
      %1206 = vdwg.mxu0
      %v1207 = vmul.f32 %v1130, 0.5
      %v1208 = vmul.f32 %v1133, 0.5
      %v1209 = vmul.f32 %v1138, 0.5
      %v1210 = vmul.f32 %v1141, 0.5
      %v1211 = vmul.f32 %v1146, 0.5
      %v1212 = vmul.f32 %v1149, 0.5
      %v1213 = vmul.f32 %v1154, 0.5
      %v1214 = vmul.f32 %v1157, 0.5
      %v1215 = vmul.f32 %v1162, 0.5
      %v1216 = vmul.f32 %v1165, 0.5
      %v1217 = vmul.f32 %v1170, 0.5
      %v1218 = vmul.f32 %v1173, 0.5
      %v1219 = vmul.f32 %v1178, 0.5
      %v1220 = vmul.f32 %v1181, 0.5
      %v1221 = vmul.f32 %v1186, 0.5
      %v1222 = vmul.f32 %v1189, 0.5
      %v1223 = vmul.f32 %v1194, 0.5
      %v1224 = vmul.f32 %v1197, 0.5
      %v1225 = vmul.f32 %v1202, 0.5
      %v1226 = vtanh.pop %v1207
      %v1227 = vtanh.pop %v1208
      %v1228 = vtanh.pop %v1209
      %v1229 = vtanh.pop %v1210
      %v1230 = vtanh.pop %v1211
      %v1231 = vtanh.pop %v1212
      %v1232 = vtanh.pop %v1213
      %v1233 = vtanh.pop %v1214
      %v1234 = vtanh.pop %v1215
      %v1235 = vtanh.pop %v1216
      %v1236 = vtanh.pop %v1217
      %v1237 = vtanh.pop %v1218
      %v1238 = vtanh.pop %v1219
      %v1239 = vtanh.pop %v1220
      %v1240 = vtanh.pop %v1221
      %v1241 = vtanh.pop %v1222
      %v1242 = vtanh.pop %v1223
      %v1243 = vtanh.pop %v1224
      %v1244 = vtanh.pop %v1225
      %v1245 = vmul.f32 %v1226, 0.5
      %v1246 = vmul.f32 %v1227, 0.5
      %v1247 = vmul.f32 %v1228, 0.5
      %v1248 = vmul.f32 %v1229, 0.5
      %v1249 = vmul.f32 %v1230, 0.5
      %v1250 = vmul.f32 %v1231, 0.5
      %v1251 = vmul.f32 %v1232, 0.5
      %v1252 = vmul.f32 %v1233, 0.5
      %v1253 = vmul.f32 %v1234, 0.5
      %v1254 = vmul.f32 %v1235, 0.5
      %v1255 = vmul.f32 %v1236, 0.5
      %v1256 = vmul.f32 %v1237, 0.5
      %v1257 = vmul.f32 %v1238, 0.5
      %v1258 = vmul.f32 %v1239, 0.5
      %v1259 = vmul.f32 %v1240, 0.5
      %v1260 = vmul.f32 %v1241, 0.5
      %v1261 = vmul.f32 %v1242, 0.5
      %v1262 = vmul.f32 %v1243, 0.5
      %v1263 = vmul.f32 %v1244, 0.5
      %v1264 = vadd.f32 %v1245, 0.5
      %v1265 = vadd.f32 %v1246, 0.5
      %v1266 = vadd.f32 %v1247, 0.5
      %v1267 = vadd.f32 %v1248, 0.5
      %v1268 = vadd.f32 %v1249, 0.5
      %v1269 = vadd.f32 %v1250, 0.5
      %v1270 = vadd.f32 %v1251, 0.5
      %v1271 = vadd.f32 %v1252, 0.5
      %v1272 = vadd.f32 %v1253, 0.5
      %v1273 = vadd.f32 %v1254, 0.5
      %v1274 = vadd.f32 %v1255, 0.5
      %v1275 = vadd.f32 %v1256, 0.5
      %v1276 = vadd.f32 %v1257, 0.5
      %v1277 = vadd.f32 %v1258, 0.5
      %v1278 = vadd.f32 %v1259, 0.5
      %v1279 = vadd.f32 %v1260, 0.5
      %v1280 = vadd.f32 %v1261, 0.5
      %v1281 = vadd.f32 %v1262, 0.5
      %v1282 = vadd.f32 %v1263, 0.5
      %v1283 = vpack.c.bf16 %v1265, %v1264
      %v1284 = vpack.c.bf16 %v1267, %v1266
      %v1285 = vpack.c.bf16 %v1269, %v1268
      %v1286 = vpack.c.bf16 %v1271, %v1270
      %v1287 = vpack.c.bf16 %v1273, %v1272
      %v1288 = vpack.c.bf16 %v1275, %v1274
      %v1289 = vpack.c.bf16 %v1277, %v1276
      %v1290 = vpack.c.bf16 %v1279, %v1278
      %v1291 = vpack.c.bf16 %v1281, %v1280
      %v1292 = vpack.c.bf16 %v1282, %v1282
      %s1293 = scalar_lea.vmem %s1, 256
      %v1294 = vld [vmem:[%s1293] sm:$0xf]
      %v1295 = vld [vmem:[%s1293 + $0x4] sm:$0xf]
      %v1296 = vld [vmem:[%s1293 + $0x8] sm:$0xf]
      %v1297 = vld [vmem:[%s1293 + $0xc] sm:$0xf]
      %v1298 = vld [vmem:[%s1293 + $0x10] sm:$0xf]
      %v1299 = vld [vmem:[%s1293 + $0x14] sm:$0xf]
      %v1300 = vld [vmem:[%s1293 + $0x18] sm:$0xf]
      %v1301 = vld [vmem:[%s1293 + $0x1c] sm:$0xf]
      %v1302 = vld [vmem:[%s1293 + $0x20] sm:$0xf]
      %v1303 = vld [vmem:[%s1293 + $0x24] sm:$0xf]
      %v1304 = vld [vmem:[%s1293 + $0x28] sm:$0xf]
      %v1305 = vld [vmem:[%s1293 + $0x2c] sm:$0xf]
      %v1306 = vld [vmem:[%s1293 + $0x30] sm:$0xf]
      %v1307 = vld [vmem:[%s1293 + $0x34] sm:$0xf]
      %v1308 = vld [vmem:[%s1293 + $0x38] sm:$0xf]
      %v1309 = vld [vmem:[%s1293 + $0x3c] sm:$0xf]
      %v1310 = vlaneseq
      %v1311 = vshrl.u32 %v1310, 7
      %v1312 = vsub.s32 4, %v1311
      %v1313 = vrot.slane %v175, %v1312
      %v1330 = vunpack.c.l.b16 %v1294
      %v1331 = vunpack.c.l.b16 %v1295
      %v1332 = vunpack.c.l.b16 %v1296
      %v1333 = vunpack.c.l.b16 %v1297
      %v1334 = vunpack.c.l.b16 %v1298
      %v1335 = vunpack.c.l.b16 %v1299
      %v1336 = vunpack.c.l.b16 %v1300
      %v1337 = vunpack.c.l.b16 %v1301
      %v1338 = vunpack.c.l.b16 %v1302
      %v1339 = vunpack.c.l.b16 %v1303
      %v1340 = vunpack.c.l.b16 %v1304
      %v1341 = vunpack.c.l.b16 %v1305
      %v1342 = vunpack.c.l.b16 %v1306
      %v1343 = vunpack.c.l.b16 %v1307
      %v1344 = vunpack.c.l.b16 %v1308
      %v1345 = vunpack.c.l.b16 %v1309
      %v1346 = vpack.c.b16 %v1331, %v1330
      %v1347 = vpack.c.b16 %v1333, %v1332
      %v1348 = vpack.c.b16 %v1335, %v1334
      %v1349 = vpack.c.b16 %v1337, %v1336
      %v1350 = vpack.c.b16 %v1339, %v1338
      %v1351 = vpack.c.b16 %v1341, %v1340
      %v1352 = vpack.c.b16 %v1343, %v1342
      %v1353 = vpack.c.b16 %v1345, %v1344
      %1362 = vmatprep.subr.bf16.mxu0 0
      %1363 = vmatpush1.bf16.msra.mxu0 %v1346
      %1364 = vmatprep.subr.bf16.mxu0 0
      %1365 = vmatpush1.bf16.msra.mxu0 %v1347
      %1366 = vmatprep.subr.bf16.mxu0 0
      %1367 = vmatpush1.bf16.msra.mxu0 %v1348
      %1368 = vmatprep.subr.bf16.mxu0 0
      %1369 = vmatpush1.bf16.msra.mxu0 %v1349
      %1370 = vmatprep.subr.bf16.mxu0 0
      %1371 = vmatpush1.bf16.msra.mxu0 %v1350
      %1372 = vmatprep.subr.bf16.mxu0 0
      %1373 = vmatpush1.bf16.msra.mxu0 %v1351
      %1374 = vmatprep.subr.bf16.mxu0 0
      %1375 = vmatpush1.bf16.msra.mxu0 %v1352
      %1376 = vmatprep.subr.bf16.mxu0 0
      %1377 = vmatpush1.bf16.msra.mxu0 %v1353
      %1378 = vmatprep.subr.bf16.mxu0 0
      %1379 = vmatpush1.bf16.msra.mxu0 0
      %1380 = vmatprep.subr.bf16.mxu0 0
      %1381 = vmatpush1.bf16.msra.mxu0 0
      %1382 = vmatprep.subr.bf16.mxu0 0
      %1383 = vmatpush1.bf16.msra.mxu0 0
      %1384 = vmatprep.subr.bf16.mxu0 0
      %1385 = vmatpush1.bf16.msra.mxu0 0
      %1386 = vmatprep.subr.bf16.mxu0 0
      %1387 = vmatpush1.bf16.msra.mxu0 0
      %1388 = vmatprep.subr.bf16.mxu0 0
      %1389 = vmatpush1.bf16.msra.mxu0 0
      %1390 = vmatprep.subr.bf16.mxu0 0
      %1391 = vmatpush1.bf16.msra.mxu0 0
      %1392 = vmatprep.subr.bf16.mxu0 0
      %1393 = vmatpush1.bf16.msra.mxu0 0
      %1394 = vmatprep.mubr.bf16.mxu0 0
      %1395 = vmatmul.mubr.bf16.gmra.mrb[0].mxu0 %v1283
      %v1396 = vpop.f32.mrb[0].mxu0
      %v1397 = vadd.f32 %v1313, %v1396
      %v1398 = vpop.f32.mrb[0].mxu0
      %v1399 = vpop.f32.mrb[0].mxu0
      %v1400 = vadd.f32 %v1313, %v1399
      %v1401 = vpop.f32.mrb[0].mxu0
      %1402 = vmatprep.mubr.bf16.mxu0 0
      %1403 = vmatmul.mubr.bf16.gmra.mrb[0].mxu0 %v1284
      %v1404 = vpop.f32.mrb[0].mxu0
      %v1405 = vadd.f32 %v1313, %v1404
      %v1406 = vpop.f32.mrb[0].mxu0
      %v1407 = vpop.f32.mrb[0].mxu0
      %v1408 = vadd.f32 %v1313, %v1407
      %v1409 = vpop.f32.mrb[0].mxu0
      %1410 = vmatprep.mubr.bf16.mxu0 0
      %1411 = vmatmul.mubr.bf16.gmra.mrb[0].mxu0 %v1285
      %v1412 = vpop.f32.mrb[0].mxu0
      %v1413 = vadd.f32 %v1313, %v1412
      %v1414 = vpop.f32.mrb[0].mxu0
      %v1415 = vpop.f32.mrb[0].mxu0
      %v1416 = vadd.f32 %v1313, %v1415
      %v1417 = vpop.f32.mrb[0].mxu0
      %1418 = vmatprep.mubr.bf16.mxu0 0
      %1419 = vmatmul.mubr.bf16.gmra.mrb[0].mxu0 %v1286
      %v1420 = vpop.f32.mrb[0].mxu0
      %v1421 = vadd.f32 %v1313, %v1420
      %v1422 = vpop.f32.mrb[0].mxu0
      %v1423 = vpop.f32.mrb[0].mxu0
      %v1424 = vadd.f32 %v1313, %v1423
      %v1425 = vpop.f32.mrb[0].mxu0
      %1426 = vmatprep.mubr.bf16.mxu0 0
      %1427 = vmatmul.mubr.bf16.gmra.mrb[0].mxu0 %v1287
      %v1428 = vpop.f32.mrb[0].mxu0
      %v1429 = vadd.f32 %v1313, %v1428
      %v1430 = vpop.f32.mrb[0].mxu0
      %v1431 = vpop.f32.mrb[0].mxu0
      %v1432 = vadd.f32 %v1313, %v1431
      %v1433 = vpop.f32.mrb[0].mxu0
      %1434 = vmatprep.mubr.bf16.mxu0 0
      %1435 = vmatmul.mubr.bf16.gmra.mrb[0].mxu0 %v1288
      %v1436 = vpop.f32.mrb[0].mxu0
      %v1437 = vadd.f32 %v1313, %v1436
      %v1438 = vpop.f32.mrb[0].mxu0
      %v1439 = vpop.f32.mrb[0].mxu0
      %v1440 = vadd.f32 %v1313, %v1439
      %v1441 = vpop.f32.mrb[0].mxu0
      %1442 = vmatprep.mubr.bf16.mxu0 0
      %1443 = vmatmul.mubr.bf16.gmra.mrb[0].mxu0 %v1289
      %v1444 = vpop.f32.mrb[0].mxu0
      %v1445 = vadd.f32 %v1313, %v1444
      %v1446 = vpop.f32.mrb[0].mxu0
      %v1447 = vpop.f32.mrb[0].mxu0
      %v1448 = vadd.f32 %v1313, %v1447
      %v1449 = vpop.f32.mrb[0].mxu0
      %1450 = vmatprep.mubr.bf16.mxu0 0
      %1451 = vmatmul.mubr.bf16.gmra.mrb[0].mxu0 %v1290
      %v1452 = vpop.f32.mrb[0].mxu0
      %v1453 = vadd.f32 %v1313, %v1452
      %v1454 = vpop.f32.mrb[0].mxu0
      %v1455 = vpop.f32.mrb[0].mxu0
      %v1456 = vadd.f32 %v1313, %v1455
      %v1457 = vpop.f32.mrb[0].mxu0
      %1458 = vmatprep.mubr.bf16.mxu0 0
      %1459 = vmatmul.mubr.bf16.gmra.mrb[0].mxu0 %v1291
      %v1460 = vpop.f32.mrb[0].mxu0
      %v1461 = vadd.f32 %v1313, %v1460
      %v1462 = vpop.f32.mrb[0].mxu0
      %v1463 = vpop.f32.mrb[0].mxu0
      %v1464 = vadd.f32 %v1313, %v1463
      %v1465 = vpop.f32.mrb[0].mxu0
      %1466 = vmatprep.mubr.bf16.mxu0 0
      %1467 = vmatmul.mubr.bf16.gmra.mrb[0].mxu0 %v1292
      %v1468 = vpop.f32.mrb[0].mxu0
      %v1469 = vadd.f32 %v1313, %v1468
      %v1470 = vpop.f32.mrb[0].mxu0
      %v1471 = vpop.f32.mrb[0].mxu0
      %v1472 = vpop.f32.mrb[0].mxu0
      %1473 = vdwg.mxu0
      %v1474 = vmul.f32 %v1397, 0.5
      %v1475 = vmul.f32 %v1400, 0.5
      %v1476 = vmul.f32 %v1405, 0.5
      %v1477 = vmul.f32 %v1408, 0.5
      %v1478 = vmul.f32 %v1413, 0.5
      %v1479 = vmul.f32 %v1416, 0.5
      %v1480 = vmul.f32 %v1421, 0.5
      %v1481 = vmul.f32 %v1424, 0.5
      %v1482 = vmul.f32 %v1429, 0.5
      %v1483 = vmul.f32 %v1432, 0.5
      %v1484 = vmul.f32 %v1437, 0.5
      %v1485 = vmul.f32 %v1440, 0.5
      %v1486 = vmul.f32 %v1445, 0.5
      %v1487 = vmul.f32 %v1448, 0.5
      %v1488 = vmul.f32 %v1453, 0.5
      %v1489 = vmul.f32 %v1456, 0.5
      %v1490 = vmul.f32 %v1461, 0.5
      %v1491 = vmul.f32 %v1464, 0.5
      %v1492 = vmul.f32 %v1469, 0.5
      %v1493 = vtanh.pop %v1474
      %v1494 = vtanh.pop %v1475
      %v1495 = vtanh.pop %v1476
      %v1496 = vtanh.pop %v1477
      %v1497 = vtanh.pop %v1478
      %v1498 = vtanh.pop %v1479
      %v1499 = vtanh.pop %v1480
      %v1500 = vtanh.pop %v1481
      %v1501 = vtanh.pop %v1482
      %v1502 = vtanh.pop %v1483
      %v1503 = vtanh.pop %v1484
      %v1504 = vtanh.pop %v1485
      %v1505 = vtanh.pop %v1486
      %v1506 = vtanh.pop %v1487
      %v1507 = vtanh.pop %v1488
      %v1508 = vtanh.pop %v1489
      %v1509 = vtanh.pop %v1490
      %v1510 = vtanh.pop %v1491
      %v1511 = vtanh.pop %v1492
      %v1512 = vmul.f32 %v1493, 0.5
      %v1513 = vmul.f32 %v1494, 0.5
      %v1514 = vmul.f32 %v1495, 0.5
      %v1515 = vmul.f32 %v1496, 0.5
      %v1516 = vmul.f32 %v1497, 0.5
      %v1517 = vmul.f32 %v1498, 0.5
      %v1518 = vmul.f32 %v1499, 0.5
      %v1519 = vmul.f32 %v1500, 0.5
      %v1520 = vmul.f32 %v1501, 0.5
      %v1521 = vmul.f32 %v1502, 0.5
      %v1522 = vmul.f32 %v1503, 0.5
      %v1523 = vmul.f32 %v1504, 0.5
      %v1524 = vmul.f32 %v1505, 0.5
      %v1525 = vmul.f32 %v1506, 0.5
      %v1526 = vmul.f32 %v1507, 0.5
      %v1527 = vmul.f32 %v1508, 0.5
      %v1528 = vmul.f32 %v1509, 0.5
      %v1529 = vmul.f32 %v1510, 0.5
      %v1530 = vmul.f32 %v1511, 0.5
      %v1531 = vadd.f32 %v1512, 0.5
      %v1532 = vadd.f32 %v1513, 0.5
      %v1533 = vadd.f32 %v1514, 0.5
      %v1534 = vadd.f32 %v1515, 0.5
      %v1535 = vadd.f32 %v1516, 0.5
      %v1536 = vadd.f32 %v1517, 0.5
      %v1537 = vadd.f32 %v1518, 0.5
      %v1538 = vadd.f32 %v1519, 0.5
      %v1539 = vadd.f32 %v1520, 0.5
      %v1540 = vadd.f32 %v1521, 0.5
      %v1541 = vadd.f32 %v1522, 0.5
      %v1542 = vadd.f32 %v1523, 0.5
      %v1543 = vadd.f32 %v1524, 0.5
      %v1544 = vadd.f32 %v1525, 0.5
      %v1545 = vadd.f32 %v1526, 0.5
      %v1546 = vadd.f32 %v1527, 0.5
      %v1547 = vadd.f32 %v1528, 0.5
      %v1548 = vadd.f32 %v1529, 0.5
      %v1549 = vadd.f32 %v1530, 0.5
      %v1550 = vpack.c.bf16 %v1532, %v1531
      %v1551 = vpack.c.bf16 %v1534, %v1533
      %v1552 = vpack.c.bf16 %v1536, %v1535
      %v1553 = vpack.c.bf16 %v1538, %v1537
      %v1554 = vpack.c.bf16 %v1540, %v1539
      %v1555 = vpack.c.bf16 %v1542, %v1541
      %v1556 = vpack.c.bf16 %v1544, %v1543
      %v1557 = vpack.c.bf16 %v1546, %v1545
      %v1558 = vpack.c.bf16 %v1548, %v1547
      %v1559 = vpack.c.bf16 %v1549, %v1549
      %s1560 = scalar_lea.vmem %s1, 320
      %v1561 = vld [vmem:[%s1560] sm:$0xf]
      %v1562 = vld [vmem:[%s1560 + $0x4] sm:$0xf]
      %v1563 = vld [vmem:[%s1560 + $0x8] sm:$0xf]
      %v1564 = vld [vmem:[%s1560 + $0xc] sm:$0xf]
      %v1565 = vld [vmem:[%s1560 + $0x10] sm:$0xf]
      %v1566 = vld [vmem:[%s1560 + $0x14] sm:$0xf]
      %v1567 = vld [vmem:[%s1560 + $0x18] sm:$0xf]
      %v1568 = vld [vmem:[%s1560 + $0x1c] sm:$0xf]
      %v1569 = vld [vmem:[%s1560 + $0x20] sm:$0xf]
      %v1570 = vld [vmem:[%s1560 + $0x24] sm:$0xf]
      %v1571 = vld [vmem:[%s1560 + $0x28] sm:$0xf]
      %v1572 = vld [vmem:[%s1560 + $0x2c] sm:$0xf]
      %v1573 = vld [vmem:[%s1560 + $0x30] sm:$0xf]
      %v1574 = vld [vmem:[%s1560 + $0x34] sm:$0xf]
      %v1575 = vld [vmem:[%s1560 + $0x38] sm:$0xf]
      %v1576 = vld [vmem:[%s1560 + $0x3c] sm:$0xf]
      %v1577 = vlaneseq
      %v1578 = vshrl.u32 %v1577, 7
      %v1579 = vsub.s32 5, %v1578
      %v1580 = vrot.slane %v175, %v1579
      %v1597 = vunpack.c.l.b16 %v1561
      %v1598 = vunpack.c.l.b16 %v1562
      %v1599 = vunpack.c.l.b16 %v1563
      %v1600 = vunpack.c.l.b16 %v1564
      %v1601 = vunpack.c.l.b16 %v1565
      %v1602 = vunpack.c.l.b16 %v1566
      %v1603 = vunpack.c.l.b16 %v1567
      %v1604 = vunpack.c.l.b16 %v1568
      %v1605 = vunpack.c.l.b16 %v1569
      %v1606 = vunpack.c.l.b16 %v1570
      %v1607 = vunpack.c.l.b16 %v1571
      %v1608 = vunpack.c.l.b16 %v1572
      %v1609 = vunpack.c.l.b16 %v1573
      %v1610 = vunpack.c.l.b16 %v1574
      %v1611 = vunpack.c.l.b16 %v1575
      %v1612 = vunpack.c.l.b16 %v1576
      %v1613 = vpack.c.b16 %v1598, %v1597
      %v1614 = vpack.c.b16 %v1600, %v1599
      %v1615 = vpack.c.b16 %v1602, %v1601
      %v1616 = vpack.c.b16 %v1604, %v1603
      %v1617 = vpack.c.b16 %v1606, %v1605
      %v1618 = vpack.c.b16 %v1608, %v1607
      %v1619 = vpack.c.b16 %v1610, %v1609
      %v1620 = vpack.c.b16 %v1612, %v1611
      %1629 = vmatprep.subr.bf16.mxu0 0
      %1630 = vmatpush1.bf16.msra.mxu0 %v1613
      %1631 = vmatprep.subr.bf16.mxu0 0
      %1632 = vmatpush1.bf16.msra.mxu0 %v1614
      %1633 = vmatprep.subr.bf16.mxu0 0
      %1634 = vmatpush1.bf16.msra.mxu0 %v1615
      %1635 = vmatprep.subr.bf16.mxu0 0
      %1636 = vmatpush1.bf16.msra.mxu0 %v1616
      %1637 = vmatprep.subr.bf16.mxu0 0
      %1638 = vmatpush1.bf16.msra.mxu0 %v1617
      %1639 = vmatprep.subr.bf16.mxu0 0
      %1640 = vmatpush1.bf16.msra.mxu0 %v1618
      %1641 = vmatprep.subr.bf16.mxu0 0
      %1642 = vmatpush1.bf16.msra.mxu0 %v1619
      %1643 = vmatprep.subr.bf16.mxu0 0
      %1644 = vmatpush1.bf16.msra.mxu0 %v1620
      %1645 = vmatprep.subr.bf16.mxu0 0
      %1646 = vmatpush1.bf16.msra.mxu0 0
      %1647 = vmatprep.subr.bf16.mxu0 0
      %1648 = vmatpush1.bf16.msra.mxu0 0
      %1649 = vmatprep.subr.bf16.mxu0 0
      %1650 = vmatpush1.bf16.msra.mxu0 0
      %1651 = vmatprep.subr.bf16.mxu0 0
      %1652 = vmatpush1.bf16.msra.mxu0 0
      %1653 = vmatprep.subr.bf16.mxu0 0
      %1654 = vmatpush1.bf16.msra.mxu0 0
      %1655 = vmatprep.subr.bf16.mxu0 0
      %1656 = vmatpush1.bf16.msra.mxu0 0
      %1657 = vmatprep.subr.bf16.mxu0 0
      %1658 = vmatpush1.bf16.msra.mxu0 0
      %1659 = vmatprep.subr.bf16.mxu0 0
      %1660 = vmatpush1.bf16.msra.mxu0 0
      %1661 = vmatprep.mubr.bf16.mxu0 0
      %1662 = vmatmul.mubr.bf16.gmra.mrb[0].mxu0 %v1550
      %v1663 = vpop.f32.mrb[0].mxu0
      %v1664 = vadd.f32 %v1580, %v1663
      %v1665 = vpop.f32.mrb[0].mxu0
      %v1666 = vpop.f32.mrb[0].mxu0
      %v1667 = vadd.f32 %v1580, %v1666
      %v1668 = vpop.f32.mrb[0].mxu0
      %1669 = vmatprep.mubr.bf16.mxu0 0
      %1670 = vmatmul.mubr.bf16.gmra.mrb[0].mxu0 %v1551
      %v1671 = vpop.f32.mrb[0].mxu0
      %v1672 = vadd.f32 %v1580, %v1671
      %v1673 = vpop.f32.mrb[0].mxu0
      %v1674 = vpop.f32.mrb[0].mxu0
      %v1675 = vadd.f32 %v1580, %v1674
      %v1676 = vpop.f32.mrb[0].mxu0
      %1677 = vmatprep.mubr.bf16.mxu0 0
      %1678 = vmatmul.mubr.bf16.gmra.mrb[0].mxu0 %v1552
      %v1679 = vpop.f32.mrb[0].mxu0
      %v1680 = vadd.f32 %v1580, %v1679
      %v1681 = vpop.f32.mrb[0].mxu0
      %v1682 = vpop.f32.mrb[0].mxu0
      %v1683 = vadd.f32 %v1580, %v1682
      %v1684 = vpop.f32.mrb[0].mxu0
      %1685 = vmatprep.mubr.bf16.mxu0 0
      %1686 = vmatmul.mubr.bf16.gmra.mrb[0].mxu0 %v1553
      %v1687 = vpop.f32.mrb[0].mxu0
      %v1688 = vadd.f32 %v1580, %v1687
      %v1689 = vpop.f32.mrb[0].mxu0
      %v1690 = vpop.f32.mrb[0].mxu0
      %v1691 = vadd.f32 %v1580, %v1690
      %v1692 = vpop.f32.mrb[0].mxu0
      %1693 = vmatprep.mubr.bf16.mxu0 0
      %1694 = vmatmul.mubr.bf16.gmra.mrb[0].mxu0 %v1554
      %v1695 = vpop.f32.mrb[0].mxu0
      %v1696 = vadd.f32 %v1580, %v1695
      %v1697 = vpop.f32.mrb[0].mxu0
      %v1698 = vpop.f32.mrb[0].mxu0
      %v1699 = vadd.f32 %v1580, %v1698
      %v1700 = vpop.f32.mrb[0].mxu0
      %1701 = vmatprep.mubr.bf16.mxu0 0
      %1702 = vmatmul.mubr.bf16.gmra.mrb[0].mxu0 %v1555
      %v1703 = vpop.f32.mrb[0].mxu0
      %v1704 = vadd.f32 %v1580, %v1703
      %v1705 = vpop.f32.mrb[0].mxu0
      %v1706 = vpop.f32.mrb[0].mxu0
      %v1707 = vadd.f32 %v1580, %v1706
      %v1708 = vpop.f32.mrb[0].mxu0
      %1709 = vmatprep.mubr.bf16.mxu0 0
      %1710 = vmatmul.mubr.bf16.gmra.mrb[0].mxu0 %v1556
      %v1711 = vpop.f32.mrb[0].mxu0
      %v1712 = vadd.f32 %v1580, %v1711
      %v1713 = vpop.f32.mrb[0].mxu0
      %v1714 = vpop.f32.mrb[0].mxu0
      %v1715 = vadd.f32 %v1580, %v1714
      %v1716 = vpop.f32.mrb[0].mxu0
      %1717 = vmatprep.mubr.bf16.mxu0 0
      %1718 = vmatmul.mubr.bf16.gmra.mrb[0].mxu0 %v1557
      %v1719 = vpop.f32.mrb[0].mxu0
      %v1720 = vadd.f32 %v1580, %v1719
      %v1721 = vpop.f32.mrb[0].mxu0
      %v1722 = vpop.f32.mrb[0].mxu0
      %v1723 = vadd.f32 %v1580, %v1722
      %v1724 = vpop.f32.mrb[0].mxu0
      %1725 = vmatprep.mubr.bf16.mxu0 0
      %1726 = vmatmul.mubr.bf16.gmra.mrb[0].mxu0 %v1558
      %v1727 = vpop.f32.mrb[0].mxu0
      %v1728 = vadd.f32 %v1580, %v1727
      %v1729 = vpop.f32.mrb[0].mxu0
      %v1730 = vpop.f32.mrb[0].mxu0
      %v1731 = vadd.f32 %v1580, %v1730
      %v1732 = vpop.f32.mrb[0].mxu0
      %1733 = vmatprep.mubr.bf16.mxu0 0
      %1734 = vmatmul.mubr.bf16.gmra.mrb[0].mxu0 %v1559
      %v1735 = vpop.f32.mrb[0].mxu0
      %v1736 = vadd.f32 %v1580, %v1735
      %v1737 = vpop.f32.mrb[0].mxu0
      %v1738 = vpop.f32.mrb[0].mxu0
      %v1739 = vpop.f32.mrb[0].mxu0
      %1740 = vdwg.mxu0
      %v1741 = vmul.f32 %v1664, 0.5
      %v1742 = vmul.f32 %v1667, 0.5
      %v1743 = vmul.f32 %v1672, 0.5
      %v1744 = vmul.f32 %v1675, 0.5
      %v1745 = vmul.f32 %v1680, 0.5
      %v1746 = vmul.f32 %v1683, 0.5
      %v1747 = vmul.f32 %v1688, 0.5
      %v1748 = vmul.f32 %v1691, 0.5
      %v1749 = vmul.f32 %v1696, 0.5
      %v1750 = vmul.f32 %v1699, 0.5
      %v1751 = vmul.f32 %v1704, 0.5
      %v1752 = vmul.f32 %v1707, 0.5
      %v1753 = vmul.f32 %v1712, 0.5
      %v1754 = vmul.f32 %v1715, 0.5
      %v1755 = vmul.f32 %v1720, 0.5
      %v1756 = vmul.f32 %v1723, 0.5
      %v1757 = vmul.f32 %v1728, 0.5
      %v1758 = vmul.f32 %v1731, 0.5
      %v1759 = vmul.f32 %v1736, 0.5
      %v1760 = vtanh.pop %v1741
      %v1761 = vtanh.pop %v1742
      %v1762 = vtanh.pop %v1743
      %v1763 = vtanh.pop %v1744
      %v1764 = vtanh.pop %v1745
      %v1765 = vtanh.pop %v1746
      %v1766 = vtanh.pop %v1747
      %v1767 = vtanh.pop %v1748
      %v1768 = vtanh.pop %v1749
      %v1769 = vtanh.pop %v1750
      %v1770 = vtanh.pop %v1751
      %v1771 = vtanh.pop %v1752
      %v1772 = vtanh.pop %v1753
      %v1773 = vtanh.pop %v1754
      %v1774 = vtanh.pop %v1755
      %v1775 = vtanh.pop %v1756
      %v1776 = vtanh.pop %v1757
      %v1777 = vtanh.pop %v1758
      %v1778 = vtanh.pop %v1759
      %v1779 = vmul.f32 %v1760, 0.5
      %v1780 = vmul.f32 %v1761, 0.5
      %v1781 = vmul.f32 %v1762, 0.5
      %v1782 = vmul.f32 %v1763, 0.5
      %v1783 = vmul.f32 %v1764, 0.5
      %v1784 = vmul.f32 %v1765, 0.5
      %v1785 = vmul.f32 %v1766, 0.5
      %v1786 = vmul.f32 %v1767, 0.5
      %v1787 = vmul.f32 %v1768, 0.5
      %v1788 = vmul.f32 %v1769, 0.5
      %v1789 = vmul.f32 %v1770, 0.5
      %v1790 = vmul.f32 %v1771, 0.5
      %v1791 = vmul.f32 %v1772, 0.5
      %v1792 = vmul.f32 %v1773, 0.5
      %v1793 = vmul.f32 %v1774, 0.5
      %v1794 = vmul.f32 %v1775, 0.5
      %v1795 = vmul.f32 %v1776, 0.5
      %v1796 = vmul.f32 %v1777, 0.5
      %v1797 = vmul.f32 %v1778, 0.5
      %v1798 = vadd.f32 %v1779, 0.5
      %v1799 = vadd.f32 %v1780, 0.5
      %v1800 = vadd.f32 %v1781, 0.5
      %v1801 = vadd.f32 %v1782, 0.5
      %v1802 = vadd.f32 %v1783, 0.5
      %v1803 = vadd.f32 %v1784, 0.5
      %v1804 = vadd.f32 %v1785, 0.5
      %v1805 = vadd.f32 %v1786, 0.5
      %v1806 = vadd.f32 %v1787, 0.5
      %v1807 = vadd.f32 %v1788, 0.5
      %v1808 = vadd.f32 %v1789, 0.5
      %v1809 = vadd.f32 %v1790, 0.5
      %v1810 = vadd.f32 %v1791, 0.5
      %v1811 = vadd.f32 %v1792, 0.5
      %v1812 = vadd.f32 %v1793, 0.5
      %v1813 = vadd.f32 %v1794, 0.5
      %v1814 = vadd.f32 %v1795, 0.5
      %v1815 = vadd.f32 %v1796, 0.5
      %v1816 = vadd.f32 %v1797, 0.5
      %vm1817 = vcmask 1048128
      %1818 = vst.msk [vmem:[%s172] sm:$0xff] %vm1817, 0.0
      %1819 = vst.msk [vmem:[%s172 + $0x8] sm:$0xff] %vm1817, 0.0
      %1820 = vst.msk [vmem:[%s172 + $0x10] sm:$0xff] %vm1817, 0.0
      %1821 = vst.msk [vmem:[%s172 + $0x18] sm:$0xff] %vm1817, 0.0
      %1822 = vst.msk [vmem:[%s172 + $0x20] sm:$0xff] %vm1817, 0.0
      %1823 = vst.msk [vmem:[%s172 + $0x28] sm:$0xff] %vm1817, 0.0
      %1824 = vst.msk [vmem:[%s172 + $0x30] sm:$0xff] %vm1817, 0.0
      %1825 = vst.msk [vmem:[%s172 + $0x38] sm:$0xff] %vm1817, 0.0
      %1826 = vst.msk [vmem:[%s172 + $0x40] sm:$0xff] %vm1817, 0.0
      %1827 = vst.msk [vmem:[%s172 + $0x48] sm:$0xff] %vm1817, 0.0
      %1828 = vst.msk [vmem:[%s172 + $0x50] sm:$0xff] %vm1817, 0.0
      %1829 = vst.msk [vmem:[%s172 + $0x58] sm:$0xff] %vm1817, 0.0
      %1830 = vst.msk [vmem:[%s172 + $0x60] sm:$0xff] %vm1817, 0.0
      %1831 = vst.msk [vmem:[%s172 + $0x68] sm:$0xff] %vm1817, 0.0
      %1832 = vst.msk [vmem:[%s172 + $0x70] sm:$0xff] %vm1817, 0.0
      %1833 = vst.msk [vmem:[%s172 + $0x78] sm:$0xff] %vm1817, 0.0
      %1834 = vst.msk [vmem:[%s172 + $0x80] sm:$0xff] %vm1817, 0.0
      %1835 = vst.msk [vmem:[%s172 + $0x88] sm:$0xff] %vm1817, 0.0
      %1836 = vst.msk [vmem:[%s172 + $0x90] sm:$0xff] %vm1817, 0.0
      %vm1837 = vcmask 326656
      %1838 = vst.msk [vmem:[%s172] sm:$0xff] %vm1837, %v997
      %1839 = vst.msk [vmem:[%s172 + $0x8] sm:$0xff] %vm1837, %v998
      %1840 = vst.msk [vmem:[%s172 + $0x10] sm:$0xff] %vm1837, %v999
      %1841 = vst.msk [vmem:[%s172 + $0x18] sm:$0xff] %vm1837, %v1000
      %1842 = vst.msk [vmem:[%s172 + $0x20] sm:$0xff] %vm1837, %v1001
      %1843 = vst.msk [vmem:[%s172 + $0x28] sm:$0xff] %vm1837, %v1002
      %1844 = vst.msk [vmem:[%s172 + $0x30] sm:$0xff] %vm1837, %v1003
      %1845 = vst.msk [vmem:[%s172 + $0x38] sm:$0xff] %vm1837, %v1004
      %1846 = vst.msk [vmem:[%s172 + $0x40] sm:$0xff] %vm1837, %v1005
      %1847 = vst.msk [vmem:[%s172 + $0x48] sm:$0xff] %vm1837, %v1006
      %1848 = vst.msk [vmem:[%s172 + $0x50] sm:$0xff] %vm1837, %v1007
      %1849 = vst.msk [vmem:[%s172 + $0x58] sm:$0xff] %vm1837, %v1008
      %1850 = vst.msk [vmem:[%s172 + $0x60] sm:$0xff] %vm1837, %v1009
      %1851 = vst.msk [vmem:[%s172 + $0x68] sm:$0xff] %vm1837, %v1010
      %1852 = vst.msk [vmem:[%s172 + $0x70] sm:$0xff] %vm1837, %v1011
      %1853 = vst.msk [vmem:[%s172 + $0x78] sm:$0xff] %vm1837, %v1012
      %1854 = vst.msk [vmem:[%s172 + $0x80] sm:$0xff] %vm1837, %v1013
      %1855 = vst.msk [vmem:[%s172 + $0x88] sm:$0xff] %vm1837, %v1014
      %1856 = vst.msk [vmem:[%s172 + $0x90] sm:$0xff] %vm1837, %v1015
      %1876 = vrot.lane.b32.xlu0 %v1798, 40
      %v1877 = vpop.permute.xlu0 %1876
      %1878 = vrot.lane.b32.xlu0 %v1799, 40
      %v1879 = vpop.permute.xlu0 %1878
      %1880 = vrot.lane.b32.xlu0 %v1800, 40
      %v1881 = vpop.permute.xlu0 %1880
      %1882 = vrot.lane.b32.xlu0 %v1801, 40
      %v1883 = vpop.permute.xlu0 %1882
      %1884 = vrot.lane.b32.xlu0 %v1802, 40
      %v1885 = vpop.permute.xlu0 %1884
      %1886 = vrot.lane.b32.xlu0 %v1803, 40
      %v1887 = vpop.permute.xlu0 %1886
      %1888 = vrot.lane.b32.xlu0 %v1804, 40
      %v1889 = vpop.permute.xlu0 %1888
      %1890 = vrot.lane.b32.xlu0 %v1805, 40
      %v1891 = vpop.permute.xlu0 %1890
      %1892 = vrot.lane.b32.xlu0 %v1806, 40
      %v1893 = vpop.permute.xlu0 %1892
      %1894 = vrot.lane.b32.xlu0 %v1807, 40
      %v1895 = vpop.permute.xlu0 %1894
      %1896 = vrot.lane.b32.xlu0 %v1808, 40
      %v1897 = vpop.permute.xlu0 %1896
      %1898 = vrot.lane.b32.xlu0 %v1809, 40
      %v1899 = vpop.permute.xlu0 %1898
      %1900 = vrot.lane.b32.xlu0 %v1810, 40
      %v1901 = vpop.permute.xlu0 %1900
      %1902 = vrot.lane.b32.xlu0 %v1811, 40
      %v1903 = vpop.permute.xlu0 %1902
      %1904 = vrot.lane.b32.xlu0 %v1812, 40
      %v1905 = vpop.permute.xlu0 %1904
      %1906 = vrot.lane.b32.xlu0 %v1813, 40
      %v1907 = vpop.permute.xlu0 %1906
      %1908 = vrot.lane.b32.xlu0 %v1814, 40
      %v1909 = vpop.permute.xlu0 %1908
      %1910 = vrot.lane.b32.xlu0 %v1815, 40
      %v1911 = vpop.permute.xlu0 %1910
      %1912 = vrot.lane.b32.xlu0 %v1816, 40
      %v1913 = vpop.permute.xlu0 %1912
      %vm1933 = vcmask 589120
      %1934 = vst.msk [vmem:[%s172] sm:$0xff] %vm1933, %v1877
      %1935 = vst.msk [vmem:[%s172 + $0x8] sm:$0xff] %vm1933, %v1879
      %1936 = vst.msk [vmem:[%s172 + $0x10] sm:$0xff] %vm1933, %v1881
      %1937 = vst.msk [vmem:[%s172 + $0x18] sm:$0xff] %vm1933, %v1883
      %1938 = vst.msk [vmem:[%s172 + $0x20] sm:$0xff] %vm1933, %v1885
      %1939 = vst.msk [vmem:[%s172 + $0x28] sm:$0xff] %vm1933, %v1887
      %1940 = vst.msk [vmem:[%s172 + $0x30] sm:$0xff] %vm1933, %v1889
      %1941 = vst.msk [vmem:[%s172 + $0x38] sm:$0xff] %vm1933, %v1891
      %1942 = vst.msk [vmem:[%s172 + $0x40] sm:$0xff] %vm1933, %v1893
      %1943 = vst.msk [vmem:[%s172 + $0x48] sm:$0xff] %vm1933, %v1895
      %1944 = vst.msk [vmem:[%s172 + $0x50] sm:$0xff] %vm1933, %v1897
      %1945 = vst.msk [vmem:[%s172 + $0x58] sm:$0xff] %vm1933, %v1899
      %1946 = vst.msk [vmem:[%s172 + $0x60] sm:$0xff] %vm1933, %v1901
      %1947 = vst.msk [vmem:[%s172 + $0x68] sm:$0xff] %vm1933, %v1903
      %1948 = vst.msk [vmem:[%s172 + $0x70] sm:$0xff] %vm1933, %v1905
      %1949 = vst.msk [vmem:[%s172 + $0x78] sm:$0xff] %vm1933, %v1907
      %1950 = vst.msk [vmem:[%s172 + $0x80] sm:$0xff] %vm1933, %v1909
      %1951 = vst.msk [vmem:[%s172 + $0x88] sm:$0xff] %vm1933, %v1911
      %1952 = vst.msk [vmem:[%s172 + $0x90] sm:$0xff] %vm1933, %v1913
      %s1953 = smul.u32 19, %s14
      %p1954 = scmp.lt.s32.totalorder %s1953, 37
      %s1955 = scalar_select %p1954, %s1953, 37
      %s1956 = smul.addr %s1955, 8
      %s1957 = scalar_lea.vmem %s3, %s1956
      // Predicated region
      $region33: #{sparse_kl_autoencoder_forward.1} parent=31 // pred_check
        %p1958 = pneg %p100
      $region34: #{sparse_kl_autoencoder_forward.1} parent=31 // pred_check_branch
        %1960 = sbr.rel (%p1958) target = $region36
      $region35: #{sparse_kl_autoencoder_forward.1} parent=31 // pred_region
        %s1961 = smul.u32 19, %s14
      $region36: #{sparse_kl_autoencoder_forward.1} parent=31 // pred_fallthru
        _
    $region32: #{sparse_kl_autoencoder_forward.1} parent=5 // pred_fallthru
      _
    %p1962 = scmp.le.s32.totalorder 2, %s9
    // Predicated region
    $region37: #{sparse_kl_autoencoder_forward.1} parent=5 // pred_check
      %p1963 = pneg %p1962
    $region38: #{sparse_kl_autoencoder_forward.1} parent=5 // pred_check_branch
      %1965 = sbr.rel (%p1963) target = $region40
    $region39: #{sparse_kl_autoencoder_forward.1} parent=5 // pred_region
      %s1966 = ssub.s32 %s9, 2
      // Predicated region
      $region41: #{sparse_kl_autoencoder_forward.1} parent=39 // pred_check
        %p1967 = pneg %p106
      $region42: #{sparse_kl_autoencoder_forward.1} parent=39 // pred_check_branch
        %1969 = sbr.rel (%p1967) target = $region44
      $region43: #{sparse_kl_autoencoder_forward.1} parent=39 // pred_region
        %s1970 = smul.u32 19, %s15
        %p1971 = scmp.lt.s32.totalorder %s1970, 37
        %s1972 = scalar_select %p1971, %s1970, 37
        %s1973 = smul.addr %s1972, 8
        %s1974 = scalar_lea.vmem %s3, %s1973
      $region44: #{sparse_kl_autoencoder_forward.1} parent=39 // pred_fallthru
        _
    $region40: #{sparse_kl_autoencoder_forward.1} parent=5 // pred_fallthru
      _
  $region6: #{sparse_kl_autoencoder_forward.1} parent=0 // loop_footer
    %s13 = sadd.s32 1, %s9
  $region7: #{sparse_kl_autoencoder_forward.1} parent=0 // loop_footer_branch
    %8 = sbr.rel target = $region3
  $region8: #{sparse_kl_autoencoder_forward.1} parent=0 // loop_exit
    _

</llo_original>
